<compile_context>
chip_gen: v5e
topology: v5e:2x2
jax: 0.10.0
libtpu: 0.0.40
codegen_flags: <defaults>
</compile_context>

<pallas_src>
import math

import jax
import jax.numpy as jnp
import numpy as np
from jax import lax
from jax.experimental import pallas as pl
from jax.experimental.pallas import tpu as pltpu

# ----- constants mirroring Loss_DR / SigmoidDRLoss defaults -----
_MARGIN = 0.5
_POS_LAMBDA = 1.0
_NEG_LAMBDA = 0.1 / math.log(3.5)
_L = 6.0
_TAU = 4.0
_RECON_SCALE = 1e-6

_NEG_BIG = -1e30          # finite "-inf" sentinel; keeps exp()/max() NaN-free
_LANES = 640              # 128 anchors * 5 interleaved values per row
_BLOCK_ROWS = 1024        # 1024 x 640 f32 = 2.5 MiB per input block
_NSTATS = 16

_MSE_LANES = 512
_MSE_BLOCK_ROWS = 1024    # 1024 x 512 f32 = 2 MiB per input block


def _round_up(x, m):
    return -(-x // m) * m


# ----------------------------------------------------------------------------
# Main anchor-statistics kernel
# ----------------------------------------------------------------------------
def _make_loss_dr_kernel(valid_rows, needs_row_mask):
    inv_nl = 1.0 / _NEG_LAMBDA
    inv_pl = 1.0 / _POS_LAMBDA

    def kernel(o_ref, l_ref, stats_ref, sl1_acc, cnt_acc, mx_acc, sw_acc):
        step = pl.program_id(0)

        @pl.when(step == 0)
        def _init():
            sl1_acc[...] = jnp.zeros_like(sl1_acc)
            cnt_acc[...] = jnp.zeros_like(cnt_acc)
            sw_acc[...] = jnp.zeros_like(sw_acc)
            mx_acc[...] = jnp.full(mx_acc.shape, _NEG_BIG, jnp.float32)

        br, w = o_ref.shape          # (block_rows, 640)
        g = br // 8
        base_row = step * br

        # lane pattern is hoisted: depends only on the lane index
        lane = lax.broadcasted_iota(jnp.int32, (8, w), 1) % 5
        is_c0 = lane == 0
        is_reg = jnp.logical_not(is_c0)
        sub = lax.broadcasted_iota(jnp.int32, (8, w), 0)

        def load(ref, gi):
            r0 = pl.multiple_of(gi * 8, 8)
            return ref[pl.ds(r0, 8), :].astype(jnp.float32)

        def c0_valid(gi):
            # mask the (possible) partial tail block by global row index
            if needs_row_mask:
                rv = (base_row + gi * 8 + sub) < valid_rows
                return jnp.logical_and(is_c0, rv)
            return is_c0

        # ---------- pass 1: SmoothL1 sums, counts, per-lane running max ----
        def pass1(gi, carry):
            sl1, cp, cn, ccp, ccn, mxn, mxp = carry
            o = load(o_ref, gi)
            l = load(l_ref, gi)
            c0v = c0_valid(gi)

            # broadcast each anchor's class label to its 4 regression lanes
            # (log-depth chain; wrap-around only re-introduces zeros)
            lc = jnp.where(c0v, l, 0.0)
            b1 = lc + jnp.roll(lc, 1, axis=1)
            b2 = b1 + jnp.roll(b1, 2, axis=1)
            b = b2 + jnp.roll(lc, 4, axis=1)
            posb = b > 0.5
            negb = b < -0.5
            c0_pos = jnp.logical_and(posb, is_c0)
            c0_neg = jnp.logical_and(negb, is_c0)
            reg_pos = jnp.logical_and(posb, is_reg)

            # SmoothL1 (beta=1) on regression slots of positive anchors
            d = o - l
            ad = jnp.abs(d)
            sl1_v = jnp.where(ad < 1.0, 0.5 * d * d, ad - 0.5)
            sl1 = sl1 + jnp.where(reg_pos, sl1_v, 0.0)

            # counts / correctness on the class slot (compare reused)
            o_ge = o >= 0.5
            cp = cp + c0_pos.astype(jnp.float32)
            cn = cn + c0_neg.astype(jnp.float32)
            ccp = ccp + jnp.logical_and(c0_pos, o_ge).astype(jnp.float32)
            ccn = ccn + jnp.logical_and(
                c0_neg, jnp.logical_not(o_ge)).astype(jnp.float32)

            # per-lane running max of the DR softmax arguments
            zn = jnp.where(c0_neg, o * inv_nl, _NEG_BIG)
            zp = jnp.where(c0_pos, -o * inv_pl, _NEG_BIG)
            mxn = jnp.maximum(mxn, zn)
            mxp = jnp.maximum(mxp, zp)
            return sl1, cp, cn, ccp, ccn, mxn, mxp

        zeros = jnp.zeros((8, w), jnp.float32)
        negs = jnp.full((8, w), _NEG_BIG, jnp.float32)
        sl1, cp, cn, ccp, ccn, mxn_b, mxp_b = lax.fori_loop(
            0, g, pass1, (zeros, zeros, zeros, zeros, zeros, negs, negs))

        sl1_acc[...] += sl1
        cnt_acc[0] += cp
        cnt_acc[1] += cn
        cnt_acc[2] += ccp
        cnt_acc[3] += ccn

        # merge the block max into the running max; rescale S/W once per step
        mn = jnp.maximum(mx_acc[0], mxn_b)
        mp = jnp.maximum(mx_acc[1], mxp_b)
        rn = jnp.exp(mx_acc[0] - mn)
        rp = jnp.exp(mx_acc[1] - mp)
        mx_acc[0] = mn
        mx_acc[1] = mp
        sn = sw_acc[0] * rn
        wn = sw_acc[1] * rn
        sp = sw_acc[2] * rp
        wp = sw_acc[3] * rp

        # ---------- pass 2: exp-sum accumulation with the final block max ---
        # (masked lanes sit at -1e30; their exp underflows to 0, and lanes
        #  that never see a genuine entry are annihilated at finalize)
        def pass2(gi, carry):
            sn, wn, sp, wp = carry
            o = load(o_ref, gi)
            l = load(l_ref, gi)
            c0v = c0_valid(gi)
            lp = jnp.logical_and(c0v, l > 0.5)
            ln = jnp.logical_and(c0v, l < -0.5)
            oc = jnp.where(c0v, o, 0.0)
            zn = jnp.where(ln, o * inv_nl, _NEG_BIG)
            zp = jnp.where(lp, -o * inv_pl, _NEG_BIG)
            en = jnp.exp(zn - mn)
            ep = jnp.exp(zp - mp)
            return sn + en, wn + en * oc, sp + ep, wp + ep * oc

        sn, wn, sp, wp = lax.fori_loop(0, g, pass2, (sn, wn, sp, wp))
        sw_acc[0] = sn
        sw_acc[1] = wn
        sw_acc[2] = sp
        sw_acc[3] = wp

        @pl.when(step == pl.num_programs(0) - 1)
        def _finalize():
            s = sl1_acc[...]
            for j in range(4):                       # per-coord SmoothL1 sums
                stats_ref[j] = jnp.sum(jnp.where(lane == j + 1, s, 0.0))
            for k in range(4):                       # counts / correct
                stats_ref[4 + k] = jnp.sum(cnt_acc[k])
            for k in range(2):                       # softmax partials (S, W)
                m = mx_acc[k]
                mg = jnp.max(m)
                r = jnp.exp(m - mg)
                stats_ref[8 + 2 * k] = jnp.sum(sw_acc[2 * k] * r)
                stats_ref[9 + 2 * k] = jnp.sum(sw_acc[2 * k + 1] * r)
                stats_ref[12 + k] = mg               # global max (for merging)
            stats_ref[14] = jnp.float32(0.0)
            stats_ref[15] = jnp.float32(0.0)

    return kernel


def _anchor_stats(output, labels):
    outf = output.reshape(-1)
    labf = labels.reshape(-1)
    assert outf.shape[0] == labf.shape[0] and outf.shape[0] % 5 == 0
    n_anchors = outf.shape[0] // 5

    # Lane-dense view: 128 anchors x 5 interleaved values per 640-wide row.
    # A pad (full-array copy) only triggers when n_anchors % 128 != 0;
    # the (possible) partial tail *block* is handled by in-kernel row masking.
    pad_anchors = (-n_anchors) % 128
    if pad_anchors:
        outf = jnp.pad(outf, (0, pad_anchors * 5))
        labf = jnp.pad(labf, (0, pad_anchors * 5))   # zero labels => "ignore"
    m_rows = outf.shape[0] // _LANES
    out2 = outf.reshape(m_rows, _LANES)
    lab2 = labf.reshape(m_rows, _LANES)

    block_rows = min(_BLOCK_ROWS, _round_up(m_rows, 8))
    grid_n = pl.cdiv(m_rows, block_rows)
    needs_mask = (m_rows % block_rows) != 0

    n_elems = int(out2.size)
    cost = pl.CostEstimate(
        flops=60 * n_elems,
        transcendentals=2 * n_elems,
        bytes_accessed=int(out2.size * out2.dtype.itemsize
                           + lab2.size * lab2.dtype.itemsize) + _NSTATS * 4)

    # 2 inputs x 2 pipeline buffers + accumulator scratch + headroom
    vmem_limit = int(4 * block_rows * _LANES * 4 + (8 << 20))

    return pl.pallas_call(
        _make_loss_dr_kernel(m_rows, needs_mask),
        out_shape=jax.ShapeDtypeStruct((_NSTATS,), jnp.float32),
        grid=(grid_n,),
        in_specs=[pl.BlockSpec((block_rows, _LANES), lambda i: (i, 0)),
                  pl.BlockSpec((block_rows, _LANES), lambda i: (i, 0))],
        out_specs=pl.BlockSpec(memory_space=pltpu.MemorySpace.SMEM),
        scratch_shapes=[pltpu.VMEM((8, _LANES), jnp.float32),       # sl1
                        pltpu.VMEM((4, 8, _LANES), jnp.float32),    # counts
                        pltpu.VMEM((2, 8, _LANES), jnp.float32),    # running max
                        pltpu.VMEM((4, 8, _LANES), jnp.float32)],   # S/W partials
        compiler_params=pltpu.CompilerParams(
            dimension_semantics=("arbitrary",),
            vmem_limit_bytes=vmem_limit),
        cost_estimate=cost,
    )(out2, lab2)


# ----------------------------------------------------------------------------
# Reconstruction MSE kernel (sum of squared differences)
# ----------------------------------------------------------------------------
def _make_sqdiff_kernel(valid_rows, needs_mask):
    def kernel(x_ref, y_ref, out_ref, acc_ref):
        step = pl.program_id(0)

        @pl.when(step == 0)
        def _init():
            acc_ref[...] = jnp.zeros_like(acc_ref)

        br, w = x_ref.shape
        g = br // 8
        base_row = step * br
        sub = lax.broadcasted_iota(jnp.int32, (8, w), 0)

        def body(gi, acc):
            r0 = pl.multiple_of(gi * 8, 8)
            d = (x_ref[pl.ds(r0, 8), :].astype(jnp.float32)
                 - y_ref[pl.ds(r0, 8), :].astype(jnp.float32))
            if needs_mask:
                rv = (base_row + gi * 8 + sub) < valid_rows
                d = jnp.where(rv, d, 0.0)
            return acc + d * d

        acc_ref[...] += lax.fori_loop(0, g, body, jnp.zeros((8, w), jnp.float32))

        @pl.when(step == pl.num_programs(0) - 1)
        def _finalize():
            out_ref[0] = jnp.sum(acc_ref[...])

    return kernel


def _sq_diff_sum(pred, target):
    pf = pred.reshape(-1)
    tf = target.reshape(-1)
    assert pf.shape == tf.shape
    n = pf.shape[0]

    pad = (-n) % _MSE_LANES
    if pad:                       # zero padding contributes 0 to the sum
        pf = jnp.pad(pf, (0, pad))
        tf = jnp.pad(tf, (0, pad))
    rows = (n + pad) // _MSE_LANES
    p2 = pf.reshape(rows, _MSE_LANES)
    t2 = tf.reshape(rows, _MSE_LANES)

    block_rows = min(_MSE_BLOCK_ROWS, _round_up(rows, 8))
    grid_n = pl.cdiv(rows, block_rows)
    needs_mask = (rows % block_rows) != 0

    out = pl.pallas_call(
        _make_sqdiff_kernel(rows, needs_mask),
        out_shape=jax.ShapeDtypeStruct((1,), jnp.float32),
        grid=(grid_n,),
        in_specs=[pl.BlockSpec((block_rows, _MSE_LANES), lambda i: (i, 0)),
                  pl.BlockSpec((block_rows, _MSE_LANES), lambda i: (i, 0))],
        out_specs=pl.BlockSpec(memory_space=pltpu.MemorySpace.SMEM),
        scratch_shapes=[pltpu.VMEM((8, _MSE_LANES), jnp.float32)],
        compiler_params=pltpu.CompilerParams(
            dimension_semantics=("arbitrary",),
            vmem_limit_bytes=int(4 * block_rows * _MSE_LANES * 4 + (8 << 20))),
    )(p2, t2)
    return out[0], jnp.float32(n)


# ----------------------------------------------------------------------------
# Forward wrapper (mirrors Loss_DR(num_hard=0, average=True).forward)
# ----------------------------------------------------------------------------
@jax.jit
def loss_dr_forward(output, labels, images, reconstructions):
    stats = _anchor_stats(output, labels)
    sl1_sums = stats[0:4]
    pos_cnt, neg_cnt = stats[4], stats[5]
    pos_cor, neg_cor = stats[6], stats[7]
    s_n, w_n, s_p, w_p = stats[8], stats[9], stats[10], stats[11]

    has_pos = pos_cnt > 0.0
    regress = jnp.where(has_pos, sl1_sums / jnp.maximum(pos_cnt, 1.0),
                        jnp.zeros_like(sl1_sums))

    # NOTE: if the input has zero negative anchors this is degenerate, exactly
    # as the PyTorch reference (empty softmax) is.
    neg_dist = w_n / s_n                       # softmax(neg/λn) . neg_prob
    pos_dist = w_p / jnp.maximum(s_p, 1e-30)   # softmax(-pos/λp) . pos_prob
    arg = jnp.where(has_pos,
                    _L * (neg_dist - pos_dist + _MARGIN),
                    _L * (neg_dist - 1.0 + _MARGIN))
    classify = _TAU * jnp.log1p(jnp.exp(arg)) / _L

    sq_sum, count = _sq_diff_sum(reconstructions, images)
    recon = _RECON_SCALE * (sq_sum / count)

    loss = classify + jnp.sum(regress) + recon
    pos_total = jnp.where(has_pos, pos_cnt, 0.0)
    pos_correct = jnp.where(has_pos, pos_cor, 0.0)

    return [loss, classify,
            regress[0], regress[1], regress[2], regress[3],
            pos_correct, pos_total, neg_cor, neg_cnt, recon]


# ----------------------------------------------------------------------------
# Pure-numpy reference mirroring the PyTorch forward
# ----------------------------------------------------------------------------
def _ref_forward_numpy(output, labels, images, reconstructions):
    out = np.asarray(output, np.float64).reshape(-1, 5)
    lab = np.asarray(labels, np.float64).reshape(-1, 5)
    pos = lab[:, 0] > 0.5
    neg = lab[:, 0] < -0.5
    pos_out, pos_lab = out[pos], lab[pos]
    neg_prob = out[neg, 0]

    def softmax(x):
        e = np.exp(x - np.max(x))
        return e / e.sum()

    def smooth_l1_mean(a, b):
        d = a - b
        ad = np.abs(d)
        return float(np.mean(np.where(ad < 1.0, 0.5 * d * d, ad - 0.5)))

    neg_dist = float(np.sum(softmax(neg_prob / _NEG_LAMBDA) * neg_prob))
    if pos_out.shape[0] > 0:
        pos_prob = pos_out[:, 0]
        pos_dist = float(np.sum(softmax(-pos_prob / _POS_LAMBDA) * pos_prob))
        classify = _TAU * np.log1p(np.exp(_L * (neg_dist - pos_dist + _MARGIN))) / _L
        regress = [smooth_l1_mean(pos_out[:, i], pos_lab[:, i]) for i in range(1, 5)]
        pos_correct = int((pos_prob >= 0.5).sum())
        pos_total = int(pos.sum())
    else:
        classify = _TAU * np.log1p(np.exp(_L * (neg_dist - 1.0 + _MARGIN))) / _L
        regress = [0.0, 0.0, 0.0, 0.0]
        pos_correct, pos_total = 0, 0
    recon = _RECON_SCALE * float(
        np.mean((np.asarray(reconstructions, np.float64)
                 - np.asarray(images, np.float64)) ** 2))
    loss = classify + sum(regress) + recon
    neg_correct = int((neg_prob < 0.5).sum())
    neg_total = int(neg.sum())
    return loss, classify, regress, pos_correct, pos_total, neg_correct, neg_total, recon


if __name__ == "__main__":
    key = jax.random.PRNGKey(0)
    k1, k2, k3, k4, k5 = jax.random.split(key, 5)

    B = 2
    # (B, 32, 32, 32, 4) anchors -> 262144 anchors; m_rows = 2048 so the main
    # kernel runs 2 grid steps with 1024-row blocks (exercises accumulation).
    anchor_dims = (B, 32, 32, 32, 4)
    n_anchors = int(np.prod(anchor_dims))

    # anchor class: ~1% positive, ~65% negative, rest ignore
    u = jax.random.uniform(k1, (n_anchors,))
    cls = jnp.where(u < 0.01, 1.0, jnp.where(u < 0.66, -1.0, 0.0)).astype(jnp.float32)
    cls = cls.at[0].set(1.0).at[1].set(-1.0)      # guarantee >=1 pos and >=1 neg
    reg_lab = 0.5 * jax.random.normal(k2, (n_anchors, 4), dtype=jnp.float32)
    labels = jnp.concatenate([cls[:, None], reg_lab], axis=1).reshape(*anchor_dims, 5)

    raw = jax.random.normal(k3, (n_anchors, 5), dtype=jnp.float32)
    prob = jax.nn.sigmoid(raw[:, 0:1])            # probability-like class column
    output = jnp.concatenate([prob, raw[:, 1:5]], axis=1).reshape(*anchor_dims, 5)

    images = jax.random.normal(k4, (B, 1, 64, 64, 64), dtype=jnp.float32)
    reconstructions = images + 0.05 * jax.random.normal(k5, images.shape,
                                                        dtype=jnp.float32)

    result = loss_dr_forward(output, labels, images, reconstructions)
    result = [jax.block_until_ready(r) for r in result]

    (ref_loss, ref_cls, ref_reg, ref_pc, ref_pt,
     ref_nc, ref_nt, ref_recon) = _ref_forward_numpy(
        np.asarray(output), np.asarray(labels),
        np.asarray(images), np.asarray(reconstructions))

    np.testing.assert_allclose(float(result[0]), ref_loss, rtol=5e-4, atol=1e-5)
    np.testing.assert_allclose(float(result[1]), ref_cls, rtol=5e-4, atol=1e-5)
    np.testing.assert_allclose([float(r) for r in result[2:6]], ref_reg,
                               rtol=5e-4, atol=1e-5)
    assert int(round(float(result[6]))) == ref_pc
    assert int(round(float(result[7]))) == ref_pt
    assert int(round(float(result[8]))) == ref_nc
    assert int(round(float(result[9]))) == ref_nt
    np.testing.assert_allclose(float(result[10]), ref_recon, rtol=5e-4, atol=1e-12)

    print("KERNEL_OK")
</pallas_src>

<mosaic_0001>
module attributes {stable_mosaic.version = 11 : i64} {
  func.func @kernel(%arg0: i32, %arg1: memref<1024x640xf32, #tpu.memory_space<vmem>>, %arg2: memref<1024x640xf32, #tpu.memory_space<vmem>>, %arg3: memref<16xf32, #tpu.memory_space<smem>>, %arg4: memref<8x640xf32, #tpu.memory_space<vmem>>, %arg5: memref<4x8x640xf32, #tpu.memory_space<vmem>>, %arg6: memref<2x8x640xf32, #tpu.memory_space<vmem>>, %arg7: memref<4x8x640xf32, #tpu.memory_space<vmem>>) attributes {dimension_semantics = [#tpu.dimension_semantics<arbitrary>], iteration_bounds = array<i64: 2>, scalar_prefetch = 0 : i64, scratch_operands = 4 : i64, tpu.core_type = #tpu.core_type<tc>, window_params = [{transform_indices = @transform_0, window_bounds = array<i64: 1024, 640>}, {transform_indices = @transform_1, window_bounds = array<i64: 1024, 640>}, {transform_indices = @transform_2, window_bounds = array<i64: 16>}]} {
    %c0_i32 = arith.constant 0 : i32
    %0 = arith.cmpi eq, %arg0, %c0_i32 : i32
    %1 = arith.extui %0 : i1 to i32
    %c0_i32_0 = arith.constant 0 : i32
    %2 = arith.cmpi ne, %1, %c0_i32_0 : i32
    scf.if %2 {
      %cst_83 = arith.constant 0.000000e+00 : f32
      %103 = vector.broadcast %cst_83 : f32 to vector<8x640xf32>
      %c0_84 = arith.constant 0 : index
      %c0_85 = arith.constant 0 : index
      %104 = vector.load %arg4[%c0_84, %c0_85] : memref<8x640xf32, #tpu.memory_space<vmem>>, vector<8x640xf32>
      tpu.vector_store %arg4[%c0_84, %c0_85], %103 {strides = array<i32>} : memref<8x640xf32, #tpu.memory_space<vmem>>, vector<8x640xf32>,
      %cst_86 = arith.constant 0.000000e+00 : f32
      %105 = vector.broadcast %cst_86 : f32 to vector<4x8x640xf32>
      %c0_87 = arith.constant 0 : index
      %c0_88 = arith.constant 0 : index
      %c0_89 = arith.constant 0 : index
      %106 = vector.load %arg5[%c0_87, %c0_88, %c0_89] : memref<4x8x640xf32, #tpu.memory_space<vmem>>, vector<4x8x640xf32>
      tpu.vector_store %arg5[%c0_87, %c0_88, %c0_89], %105 {strides = array<i32>} : memref<4x8x640xf32, #tpu.memory_space<vmem>>, vector<4x8x640xf32>,
      %cst_90 = arith.constant 0.000000e+00 : f32
      %107 = vector.broadcast %cst_90 : f32 to vector<4x8x640xf32>
      %c0_91 = arith.constant 0 : index
      %c0_92 = arith.constant 0 : index
      %c0_93 = arith.constant 0 : index
      %108 = vector.load %arg7[%c0_91, %c0_92, %c0_93] : memref<4x8x640xf32, #tpu.memory_space<vmem>>, vector<4x8x640xf32>
      tpu.vector_store %arg7[%c0_91, %c0_92, %c0_93], %107 {strides = array<i32>} : memref<4x8x640xf32, #tpu.memory_space<vmem>>, vector<4x8x640xf32>,
      %cst_94 = arith.constant -1.000000e+30 : f32
      %109 = vector.broadcast %cst_94 : f32 to vector<2x8x640xf32>
      %c0_95 = arith.constant 0 : index
      %c0_96 = arith.constant 0 : index
      %c0_97 = arith.constant 0 : index
      %110 = vector.load %arg6[%c0_95, %c0_96, %c0_97] : memref<2x8x640xf32, #tpu.memory_space<vmem>>, vector<2x8x640xf32>
      tpu.vector_store %arg6[%c0_95, %c0_96, %c0_97], %109 {strides = array<i32>} : memref<2x8x640xf32, #tpu.memory_space<vmem>>, vector<2x8x640xf32>,
    } else {
    }
    %3 = tpu.iota {dimensions = array<i32: 1>} : vector<8x640xi32>
    %c5_i32 = arith.constant 5 : i32
    %c0_i32_1 = arith.constant 0 : i32
    %4 = arith.cmpi eq, %c5_i32, %c0_i32_1 : i32
    %c1_i32 = arith.constant 1 : i32
    %5 = arith.select %4, %c1_i32, %c5_i32 : i32
    %6 = vector.broadcast %5 : i32 to vector<8x640xi32>
    %7 = arith.remsi %3, %6 : vector<8x640xi32>
    %c0_i32_2 = arith.constant 0 : i32
    %8 = vector.broadcast %c0_i32_2 : i32 to vector<8x640xi32>
    %9 = arith.cmpi ne, %7, %8 : vector<8x640xi32>
    %c0_i32_3 = arith.constant 0 : i32
    %10 = vector.broadcast %c0_i32_3 : i32 to vector<8x640xi32>
    %11 = arith.cmpi slt, %7, %10 : vector<8x640xi32>
    %c0_i32_4 = arith.constant 0 : i32
    %12 = arith.cmpi slt, %5, %c0_i32_4 : i32
    %13 = vector.broadcast %12 : i1 to vector<8x640xi1>
    %14 = vector.broadcast %13 : vector<8x640xi1> to vector<8x640xi1>
    %15 = arith.xori %11, %14 : vector<8x640xi1>
    %16 = arith.andi %15, %9 : vector<8x640xi1>
    %17 = vector.broadcast %5 : i32 to vector<8x640xi32>
    %18 = arith.addi %7, %17 : vector<8x640xi32>
    %19 = arith.select %16, %18, %7 : vector<8x640xi1>, vector<8x640xi32>
    %c0_i32_5 = arith.constant 0 : i32
    %20 = vector.broadcast %c0_i32_5 : i32 to vector<8x640xi32>
    %21 = arith.cmpi eq, %19, %20 : vector<8x640xi32>
    %cst = arith.constant dense<true> : vector<8x640xi1>
    %22 = arith.xori %21, %cst : vector<8x640xi1>
    %cst_6 = arith.constant 0.000000e+00 : f32
    %23 = vector.broadcast %cst_6 : f32 to vector<8x640xf32>
    %cst_7 = arith.constant -1.000000e+30 : f32
    %24 = vector.broadcast %cst_7 : f32 to vector<8x640xf32>
    %c0_i32_8 = arith.constant 0 : i32
    %c128_i32 = arith.constant 128 : i32
    %25 = arith.addi %c0_i32_8, %c128_i32 : i32
    %c1_i32_9 = arith.constant 1 : i32
    %26:7 = scf.for %arg8 = %c0_i32_8 to %25 step %c1_i32_9 iter_args(%arg9 = %23, %arg10 = %23, %arg11 = %23, %arg12 = %23, %arg13 = %23, %arg14 = %24, %arg15 = %24) -> (vector<8x640xf32>, vector<8x640xf32>, vector<8x640xf32>, vector<8x640xf32>, vector<8x640xf32>, vector<8x640xf32>, vector<8x640xf32>)  : i32 {
      %c8_i32 = arith.constant 8 : i32
      %103 = arith.muli %arg8, %c8_i32 : i32
      %104 = tpu.assume_multiple %103, 8 : i32
      %105 = arith.index_cast %104 : i32 to index
      %c0_83 = arith.constant 0 : index
      %106 = vector.load %arg1[%105, %c0_83] : memref<1024x640xf32, #tpu.memory_space<vmem>>, vector<8x640xf32>
      %c8_i32_84 = arith.constant 8 : i32
      %107 = arith.muli %arg8, %c8_i32_84 : i32
      %108 = tpu.assume_multiple %107, 8 : i32
      %109 = arith.index_cast %108 : i32 to index
      %c0_85 = arith.constant 0 : index
      %110 = vector.load %arg2[%109, %c0_85] : memref<1024x640xf32, #tpu.memory_space<vmem>>, vector<8x640xf32>
      %cst_86 = arith.constant 0.000000e+00 : f32
      %111 = vector.broadcast %cst_86 : f32 to vector<8x640xf32>
      %112 = arith.select %21, %110, %111 : vector<8x640xi1>, vector<8x640xf32>
      %113 = vector.extract_strided_slice %112 {offsets = [0, 639], sizes = [8, 1], strides = [1, 1]} : vector<8x640xf32> to vector<8x1xf32>
      %114 = vector.extract_strided_slice %112 {offsets = [0, 0], sizes = [8, 639], strides = [1, 1]} : vector<8x640xf32> to vector<8x639xf32>
      %115 = tpu.concatenate %113, %114 in 1 : vector<8x1xf32>, vector<8x639xf32> -> vector<8x640xf32>
      %116 = arith.addf %112, %115 : vector<8x640xf32>
      %117 = vector.extract_strided_slice %116 {offsets = [0, 638], sizes = [8, 2], strides = [1, 1]} : vector<8x640xf32> to vector<8x2xf32>
      %118 = vector.extract_strided_slice %116 {offsets = [0, 0], sizes = [8, 638], strides = [1, 1]} : vector<8x640xf32> to vector<8x638xf32>
      %119 = tpu.concatenate %117, %118 in 1 : vector<8x2xf32>, vector<8x638xf32> -> vector<8x640xf32>
      %120 = arith.addf %116, %119 : vector<8x640xf32>
      %121 = vector.extract_strided_slice %112 {offsets = [0, 636], sizes = [8, 4], strides = [1, 1]} : vector<8x640xf32> to vector<8x4xf32>
      %122 = vector.extract_strided_slice %112 {offsets = [0, 0], sizes = [8, 636], strides = [1, 1]} : vector<8x640xf32> to vector<8x636xf32>
      %123 = tpu.concatenate %121, %122 in 1 : vector<8x4xf32>, vector<8x636xf32> -> vector<8x640xf32>
      %124 = arith.addf %120, %123 : vector<8x640xf32>
      %cst_87 = arith.constant 5.000000e-01 : f32
      %125 = vector.broadcast %cst_87 : f32 to vector<8x640xf32>
      %126 = arith.cmpf ogt, %124, %125 : vector<8x640xf32>
      %cst_88 = arith.constant -5.000000e-01 : f32
      %127 = vector.broadcast %cst_88 : f32 to vector<8x640xf32>
      %128 = arith.cmpf olt, %124, %127 : vector<8x640xf32>
      %129 = arith.andi %126, %21 : vector<8x640xi1>
      %130 = arith.andi %128, %21 : vector<8x640xi1>
      %131 = arith.andi %126, %22 : vector<8x640xi1>
      %132 = arith.subf %106, %110 : vector<8x640xf32>
      %133 = math.absf %132 : vector<8x640xf32>
      %cst_89 = arith.constant 1.000000e+00 : f32
      %134 = vector.broadcast %cst_89 : f32 to vector<8x640xf32>
      %135 = arith.cmpf olt, %133, %134 : vector<8x640xf32>
      %cst_90 = arith.constant 5.000000e-01 : f32
      %136 = vector.broadcast %cst_90 : f32 to vector<8x640xf32>
      %137 = arith.mulf %136, %132 : vector<8x640xf32>
      %138 = arith.mulf %137, %132 : vector<8x640xf32>
      %cst_91 = arith.constant 5.000000e-01 : f32
      %139 = vector.broadcast %cst_91 : f32 to vector<8x640xf32>
      %140 = arith.subf %133, %139 : vector<8x640xf32>
      %141 = arith.select %135, %138, %140 : vector<8x640xi1>, vector<8x640xf32>
      %cst_92 = arith.constant 0.000000e+00 : f32
      %142 = vector.broadcast %cst_92 : f32 to vector<8x640xf32>
      %143 = arith.select %131, %141, %142 : vector<8x640xi1>, vector<8x640xf32>
      %144 = arith.addf %arg9, %143 : vector<8x640xf32>
      %cst_93 = arith.constant 5.000000e-01 : f32
      %145 = vector.broadcast %cst_93 : f32 to vector<8x640xf32>
      %146 = arith.cmpf oge, %106, %145 : vector<8x640xf32>
      %147 = arith.extui %129 : vector<8x640xi1> to vector<8x640xi32>
      %148 = arith.sitofp %147 : vector<8x640xi32> to vector<8x640xf32>
      %149 = arith.addf %arg10, %148 : vector<8x640xf32>
      %150 = arith.extui %130 : vector<8x640xi1> to vector<8x640xi32>
      %151 = arith.sitofp %150 : vector<8x640xi32> to vector<8x640xf32>
      %152 = arith.addf %arg11, %151 : vector<8x640xf32>
      %153 = arith.andi %129, %146 : vector<8x640xi1>
      %154 = arith.extui %153 : vector<8x640xi1> to vector<8x640xi32>
      %155 = arith.sitofp %154 : vector<8x640xi32> to vector<8x640xf32>
      %156 = arith.addf %arg12, %155 : vector<8x640xf32>
      %cst_94 = arith.constant dense<true> : vector<8x640xi1>
      %157 = arith.xori %146, %cst_94 : vector<8x640xi1>
      %158 = arith.andi %130, %157 : vector<8x640xi1>
      %159 = arith.extui %158 : vector<8x640xi1> to vector<8x640xi32>
      %160 = arith.sitofp %159 : vector<8x640xi32> to vector<8x640xf32>
      %161 = arith.addf %arg13, %160 : vector<8x640xf32>
      %cst_95 = arith.constant 12.5276299 : f32
      %162 = vector.broadcast %cst_95 : f32 to vector<8x640xf32>
      %163 = arith.mulf %106, %162 : vector<8x640xf32>
      %cst_96 = arith.constant -1.000000e+30 : f32
      %164 = vector.broadcast %cst_96 : f32 to vector<8x640xf32>
      %165 = arith.select %130, %163, %164 : vector<8x640xi1>, vector<8x640xf32>
      %cst_97 = arith.constant 0.000000e+00 : f32
      %166 = vector.broadcast %cst_97 : f32 to vector<8x640xf32>
      %167 = arith.subf %166, %106 : vector<8x640xf32>
      %cst_98 = arith.constant 1.000000e+00 : f32
      %168 = vector.broadcast %cst_98 : f32 to vector<8x640xf32>
      %169 = arith.mulf %167, %168 : vector<8x640xf32>
      %cst_99 = arith.constant -1.000000e+30 : f32
      %170 = vector.broadcast %cst_99 : f32 to vector<8x640xf32>
      %171 = arith.select %129, %169, %170 : vector<8x640xi1>, vector<8x640xf32>
      %172 = arith.maximumf %arg14, %165 : vector<8x640xf32>
      %173 = arith.maximumf %arg15, %171 : vector<8x640xf32>
      scf.yield %144, %149, %152, %156, %161, %172, %173 : vector<8x640xf32>, vector<8x640xf32>, vector<8x640xf32>, vector<8x640xf32>, vector<8x640xf32>, vector<8x640xf32>, vector<8x640xf32>
    }
    %c128_i32_10 = arith.constant 128 : i32
    %c0 = arith.constant 0 : index
    %c0_11 = arith.constant 0 : index
    %27 = vector.load %arg4[%c0, %c0_11] : memref<8x640xf32, #tpu.memory_space<vmem>>, vector<8x640xf32>
    %28 = arith.addf %27, %26#0 : vector<8x640xf32>
    %c0_12 = arith.constant 0 : index
    %c0_13 = arith.constant 0 : index
    %29 = vector.load %arg4[%c0_12, %c0_13] : memref<8x640xf32, #tpu.memory_space<vmem>>, vector<8x640xf32>
    tpu.vector_store %arg4[%c0_12, %c0_13], %28 {strides = array<i32>} : memref<8x640xf32, #tpu.memory_space<vmem>>, vector<8x640xf32>,
    %c0_14 = arith.constant 0 : index
    %c0_15 = arith.constant 0 : index
    %c0_16 = arith.constant 0 : index
    %30 = vector.load %arg5[%c0_14, %c0_15, %c0_16] : memref<4x8x640xf32, #tpu.memory_space<vmem>>, vector<1x8x640xf32>
    %31 = vector.shape_cast %30 : vector<1x8x640xf32> to vector<8x640xf32>
    %32 = arith.addf %31, %26#1 : vector<8x640xf32>
    %c0_17 = arith.constant 0 : index
    %c0_18 = arith.constant 0 : index
    %c0_19 = arith.constant 0 : index
    %33 = vector.load %arg5[%c0_17, %c0_18, %c0_19] : memref<4x8x640xf32, #tpu.memory_space<vmem>>, vector<1x8x640xf32>
    %34 = vector.shape_cast %33 : vector<1x8x640xf32> to vector<8x640xf32>
    %35 = vector.shape_cast %32 : vector<8x640xf32> to vector<1x8x640xf32>
    tpu.vector_store %arg5[%c0_17, %c0_18, %c0_19], %35 {strides = array<i32>} : memref<4x8x640xf32, #tpu.memory_space<vmem>>, vector<1x8x640xf32>,
    %c1 = arith.constant 1 : index
    %c0_20 = arith.constant 0 : index
    %c0_21 = arith.constant 0 : index
    %36 = vector.load %arg5[%c1, %c0_20, %c0_21] : memref<4x8x640xf32, #tpu.memory_space<vmem>>, vector<1x8x640xf32>
    %37 = vector.shape_cast %36 : vector<1x8x640xf32> to vector<8x640xf32>
    %38 = arith.addf %37, %26#2 : vector<8x640xf32>
    %c1_22 = arith.constant 1 : index
    %c0_23 = arith.constant 0 : index
    %c0_24 = arith.constant 0 : index
    %39 = vector.load %arg5[%c1_22, %c0_23, %c0_24] : memref<4x8x640xf32, #tpu.memory_space<vmem>>, vector<1x8x640xf32>
    %40 = vector.shape_cast %39 : vector<1x8x640xf32> to vector<8x640xf32>
    %41 = vector.shape_cast %38 : vector<8x640xf32> to vector<1x8x640xf32>
    tpu.vector_store %arg5[%c1_22, %c0_23, %c0_24], %41 {strides = array<i32>} : memref<4x8x640xf32, #tpu.memory_space<vmem>>, vector<1x8x640xf32>,
    %c2 = arith.constant 2 : index
    %c0_25 = arith.constant 0 : index
    %c0_26 = arith.constant 0 : index
    %42 = vector.load %arg5[%c2, %c0_25, %c0_26] : memref<4x8x640xf32, #tpu.memory_space<vmem>>, vector<1x8x640xf32>
    %43 = vector.shape_cast %42 : vector<1x8x640xf32> to vector<8x640xf32>
    %44 = arith.addf %43, %26#3 : vector<8x640xf32>
    %c2_27 = arith.constant 2 : index
    %c0_28 = arith.constant 0 : index
    %c0_29 = arith.constant 0 : index
    %45 = vector.load %arg5[%c2_27, %c0_28, %c0_29] : memref<4x8x640xf32, #tpu.memory_space<vmem>>, vector<1x8x640xf32>
    %46 = vector.shape_cast %45 : vector<1x8x640xf32> to vector<8x640xf32>
    %47 = vector.shape_cast %44 : vector<8x640xf32> to vector<1x8x640xf32>
    tpu.vector_store %arg5[%c2_27, %c0_28, %c0_29], %47 {strides = array<i32>} : memref<4x8x640xf32, #tpu.memory_space<vmem>>, vector<1x8x640xf32>,
    %c3 = arith.constant 3 : index
    %c0_30 = arith.constant 0 : index
    %c0_31 = arith.constant 0 : index
    %48 = vector.load %arg5[%c3, %c0_30, %c0_31] : memref<4x8x640xf32, #tpu.memory_space<vmem>>, vector<1x8x640xf32>
    %49 = vector.shape_cast %48 : vector<1x8x640xf32> to vector<8x640xf32>
    %50 = arith.addf %49, %26#4 : vector<8x640xf32>
    %c3_32 = arith.constant 3 : index
    %c0_33 = arith.constant 0 : index
    %c0_34 = arith.constant 0 : index
    %51 = vector.load %arg5[%c3_32, %c0_33, %c0_34] : memref<4x8x640xf32, #tpu.memory_space<vmem>>, vector<1x8x640xf32>
    %52 = vector.shape_cast %51 : vector<1x8x640xf32> to vector<8x640xf32>
    %53 = vector.shape_cast %50 : vector<8x640xf32> to vector<1x8x640xf32>
    tpu.vector_store %arg5[%c3_32, %c0_33, %c0_34], %53 {strides = array<i32>} : memref<4x8x640xf32, #tpu.memory_space<vmem>>, vector<1x8x640xf32>,
    %c0_35 = arith.constant 0 : index
    %c0_36 = arith.constant 0 : index
    %c0_37 = arith.constant 0 : index
    %54 = vector.load %arg6[%c0_35, %c0_36, %c0_37] : memref<2x8x640xf32, #tpu.memory_space<vmem>>, vector<1x8x640xf32>
    %55 = vector.shape_cast %54 : vector<1x8x640xf32> to vector<8x640xf32>
    %56 = arith.maximumf %55, %26#5 : vector<8x640xf32>
    %c1_38 = arith.constant 1 : index
    %c0_39 = arith.constant 0 : index
    %c0_40 = arith.constant 0 : index
    %57 = vector.load %arg6[%c1_38, %c0_39, %c0_40] : memref<2x8x640xf32, #tpu.memory_space<vmem>>, vector<1x8x640xf32>
    %58 = vector.shape_cast %57 : vector<1x8x640xf32> to vector<8x640xf32>
    %59 = arith.maximumf %58, %26#6 : vector<8x640xf32>
    %c0_41 = arith.constant 0 : index
    %c0_42 = arith.constant 0 : index
    %c0_43 = arith.constant 0 : index
    %60 = vector.load %arg6[%c0_41, %c0_42, %c0_43] : memref<2x8x640xf32, #tpu.memory_space<vmem>>, vector<1x8x640xf32>
    %61 = vector.shape_cast %60 : vector<1x8x640xf32> to vector<8x640xf32>
    %62 = arith.subf %61, %56 : vector<8x640xf32>
    %63 = math.exp %62 : vector<8x640xf32>
    %c1_44 = arith.constant 1 : index
    %c0_45 = arith.constant 0 : index
    %c0_46 = arith.constant 0 : index
    %64 = vector.load %arg6[%c1_44, %c0_45, %c0_46] : memref<2x8x640xf32, #tpu.memory_space<vmem>>, vector<1x8x640xf32>
    %65 = vector.shape_cast %64 : vector<1x8x640xf32> to vector<8x640xf32>
    %66 = arith.subf %65, %59 : vector<8x640xf32>
    %67 = math.exp %66 : vector<8x640xf32>
    %c0_47 = arith.constant 0 : index
    %c0_48 = arith.constant 0 : index
    %c0_49 = arith.constant 0 : index
    %68 = vector.load %arg6[%c0_47, %c0_48, %c0_49] : memref<2x8x640xf32, #tpu.memory_space<vmem>>, vector<1x8x640xf32>
    %69 = vector.shape_cast %68 : vector<1x8x640xf32> to vector<8x640xf32>
    %70 = vector.shape_cast %56 : vector<8x640xf32> to vector<1x8x640xf32>
    tpu.vector_store %arg6[%c0_47, %c0_48, %c0_49], %70 {strides = array<i32>} : memref<2x8x640xf32, #tpu.memory_space<vmem>>, vector<1x8x640xf32>,
    %c1_50 = arith.constant 1 : index
    %c0_51 = arith.constant 0 : index
    %c0_52 = arith.constant 0 : index
    %71 = vector.load %arg6[%c1_50, %c0_51, %c0_52] : memref<2x8x640xf32, #tpu.memory_space<vmem>>, vector<1x8x640xf32>
    %72 = vector.shape_cast %71 : vector<1x8x640xf32> to vector<8x640xf32>
    %73 = vector.shape_cast %59 : vector<8x640xf32> to vector<1x8x640xf32>
    tpu.vector_store %arg6[%c1_50, %c0_51, %c0_52], %73 {strides = array<i32>} : memref<2x8x640xf32, #tpu.memory_space<vmem>>, vector<1x8x640xf32>,
    %c0_53 = arith.constant 0 : index
    %c0_54 = arith.constant 0 : index
    %c0_55 = arith.constant 0 : index
    %74 = vector.load %arg7[%c0_53, %c0_54, %c0_55] : memref<4x8x640xf32, #tpu.memory_space<vmem>>, vector<1x8x640xf32>
    %75 = vector.shape_cast %74 : vector<1x8x640xf32> to vector<8x640xf32>
    %76 = arith.mulf %75, %63 : vector<8x640xf32>
    %c1_56 = arith.constant 1 : index
    %c0_57 = arith.constant 0 : index
    %c0_58 = arith.constant 0 : index
    %77 = vector.load %arg7[%c1_56, %c0_57, %c0_58] : memref<4x8x640xf32, #tpu.memory_space<vmem>>, vector<1x8x640xf32>
    %78 = vector.shape_cast %77 : vector<1x8x640xf32> to vector<8x640xf32>
    %79 = arith.mulf %78, %63 : vector<8x640xf32>
    %c2_59 = arith.constant 2 : index
    %c0_60 = arith.constant 0 : index
    %c0_61 = arith.constant 0 : index
    %80 = vector.load %arg7[%c2_59, %c0_60, %c0_61] : memref<4x8x640xf32, #tpu.memory_space<vmem>>, vector<1x8x640xf32>
    %81 = vector.shape_cast %80 : vector<1x8x640xf32> to vector<8x640xf32>
    %82 = arith.mulf %81, %67 : vector<8x640xf32>
    %c3_62 = arith.constant 3 : index
    %c0_63 = arith.constant 0 : index
    %c0_64 = arith.constant 0 : index
    %83 = vector.load %arg7[%c3_62, %c0_63, %c0_64] : memref<4x8x640xf32, #tpu.memory_space<vmem>>, vector<1x8x640xf32>
    %84 = vector.shape_cast %83 : vector<1x8x640xf32> to vector<8x640xf32>
    %85 = arith.mulf %84, %67 : vector<8x640xf32>
    %c0_i32_65 = arith.constant 0 : i32
    %c128_i32_66 = arith.constant 128 : i32
    %86 = arith.addi %c0_i32_65, %c128_i32_66 : i32
    %c1_i32_67 = arith.constant 1 : i32
    %87:4 = scf.for %arg8 = %c0_i32_65 to %86 step %c1_i32_67 iter_args(%arg9 = %76, %arg10 = %79, %arg11 = %82, %arg12 = %85) -> (vector<8x640xf32>, vector<8x640xf32>, vector<8x640xf32>, vector<8x640xf32>)  : i32 {
      %c8_i32 = arith.constant 8 : i32
      %103 = arith.muli %arg8, %c8_i32 : i32
      %104 = tpu.assume_multiple %103, 8 : i32
      %105 = arith.index_cast %104 : i32 to index
      %c0_83 = arith.constant 0 : index
      %106 = vector.load %arg1[%105, %c0_83] : memref<1024x640xf32, #tpu.memory_space<vmem>>, vector<8x640xf32>
      %c8_i32_84 = arith.constant 8 : i32
      %107 = arith.muli %arg8, %c8_i32_84 : i32
      %108 = tpu.assume_multiple %107, 8 : i32
      %109 = arith.index_cast %108 : i32 to index
      %c0_85 = arith.constant 0 : index
      %110 = vector.load %arg2[%109, %c0_85] : memref<1024x640xf32, #tpu.memory_space<vmem>>, vector<8x640xf32>
      %cst_86 = arith.constant 5.000000e-01 : f32
      %111 = vector.broadcast %cst_86 : f32 to vector<8x640xf32>
      %112 = arith.cmpf ogt, %110, %111 : vector<8x640xf32>
      %113 = arith.andi %21, %112 : vector<8x640xi1>
      %cst_87 = arith.constant -5.000000e-01 : f32
      %114 = vector.broadcast %cst_87 : f32 to vector<8x640xf32>
      %115 = arith.cmpf olt, %110, %114 : vector<8x640xf32>
      %116 = arith.andi %21, %115 : vector<8x640xi1>
      %cst_88 = arith.constant 0.000000e+00 : f32
      %117 = vector.broadcast %cst_88 : f32 to vector<8x640xf32>
      %118 = arith.select %21, %106, %117 : vector<8x640xi1>, vector<8x640xf32>
      %cst_89 = arith.constant 12.5276299 : f32
      %119 = vector.broadcast %cst_89 : f32 to vector<8x640xf32>
      %120 = arith.mulf %106, %119 : vector<8x640xf32>
      %cst_90 = arith.constant -1.000000e+30 : f32
      %121 = vector.broadcast %cst_90 : f32 to vector<8x640xf32>
      %122 = arith.select %116, %120, %121 : vector<8x640xi1>, vector<8x640xf32>
      %cst_91 = arith.constant 0.000000e+00 : f32
      %123 = vector.broadcast %cst_91 : f32 to vector<8x640xf32>
      %124 = arith.subf %123, %106 : vector<8x640xf32>
      %cst_92 = arith.constant 1.000000e+00 : f32
      %125 = vector.broadcast %cst_92 : f32 to vector<8x640xf32>
      %126 = arith.mulf %124, %125 : vector<8x640xf32>
      %cst_93 = arith.constant -1.000000e+30 : f32
      %127 = vector.broadcast %cst_93 : f32 to vector<8x640xf32>
      %128 = arith.select %113, %126, %127 : vector<8x640xi1>, vector<8x640xf32>
      %129 = arith.subf %122, %56 : vector<8x640xf32>
      %130 = math.exp %129 : vector<8x640xf32>
      %131 = arith.subf %128, %59 : vector<8x640xf32>
      %132 = math.exp %131 : vector<8x640xf32>
      %133 = arith.addf %arg9, %130 : vector<8x640xf32>
      %134 = arith.mulf %130, %118 : vector<8x640xf32>
      %135 = arith.addf %arg10, %134 : vector<8x640xf32>
      %136 = arith.addf %arg11, %132 : vector<8x640xf32>
      %137 = arith.mulf %132, %118 : vector<8x640xf32>
      %138 = arith.addf %arg12, %137 : vector<8x640xf32>
      scf.yield %133, %135, %136, %138 : vector<8x640xf32>, vector<8x640xf32>, vector<8x640xf32>, vector<8x640xf32>
    }
    %c128_i32_68 = arith.constant 128 : i32
    %c0_69 = arith.constant 0 : index
    %c0_70 = arith.constant 0 : index
    %c0_71 = arith.constant 0 : index
    %88 = vector.load %arg7[%c0_69, %c0_70, %c0_71] : memref<4x8x640xf32, #tpu.memory_space<vmem>>, vector<1x8x640xf32>
    %89 = vector.shape_cast %88 : vector<1x8x640xf32> to vector<8x640xf32>
    %90 = vector.shape_cast %87#0 : vector<8x640xf32> to vector<1x8x640xf32>
    tpu.vector_store %arg7[%c0_69, %c0_70, %c0_71], %90 {strides = array<i32>} : memref<4x8x640xf32, #tpu.memory_space<vmem>>, vector<1x8x640xf32>,
    %c1_72 = arith.constant 1 : index
    %c0_73 = arith.constant 0 : index
    %c0_74 = arith.constant 0 : index
    %91 = vector.load %arg7[%c1_72, %c0_73, %c0_74] : memref<4x8x640xf32, #tpu.memory_space<vmem>>, vector<1x8x640xf32>
    %92 = vector.shape_cast %91 : vector<1x8x640xf32> to vector<8x640xf32>
    %93 = vector.shape_cast %87#1 : vector<8x640xf32> to vector<1x8x640xf32>
    tpu.vector_store %arg7[%c1_72, %c0_73, %c0_74], %93 {strides = array<i32>} : memref<4x8x640xf32, #tpu.memory_space<vmem>>, vector<1x8x640xf32>,
    %c2_75 = arith.constant 2 : index
    %c0_76 = arith.constant 0 : index
    %c0_77 = arith.constant 0 : index
    %94 = vector.load %arg7[%c2_75, %c0_76, %c0_77] : memref<4x8x640xf32, #tpu.memory_space<vmem>>, vector<1x8x640xf32>
    %95 = vector.shape_cast %94 : vector<1x8x640xf32> to vector<8x640xf32>
    %96 = vector.shape_cast %87#2 : vector<8x640xf32> to vector<1x8x640xf32>
    tpu.vector_store %arg7[%c2_75, %c0_76, %c0_77], %96 {strides = array<i32>} : memref<4x8x640xf32, #tpu.memory_space<vmem>>, vector<1x8x640xf32>,
    %c3_78 = arith.constant 3 : index
    %c0_79 = arith.constant 0 : index
    %c0_80 = arith.constant 0 : index
    %97 = vector.load %arg7[%c3_78, %c0_79, %c0_80] : memref<4x8x640xf32, #tpu.memory_space<vmem>>, vector<1x8x640xf32>
    %98 = vector.shape_cast %97 : vector<1x8x640xf32> to vector<8x640xf32>
    %99 = vector.shape_cast %87#3 : vector<8x640xf32> to vector<1x8x640xf32>
    tpu.vector_store %arg7[%c3_78, %c0_79, %c0_80], %99 {strides = array<i32>} : memref<4x8x640xf32, #tpu.memory_space<vmem>>, vector<1x8x640xf32>,
    %c1_i32_81 = arith.constant 1 : i32
    %100 = arith.cmpi eq, %arg0, %c1_i32_81 : i32
    %101 = arith.extui %100 : i1 to i32
    %c0_i32_82 = arith.constant 0 : i32
    %102 = arith.cmpi ne, %101, %c0_i32_82 : i32
    scf.if %102 {
      %c0_83 = arith.constant 0 : index
      %c0_84 = arith.constant 0 : index
      %103 = vector.load %arg4[%c0_83, %c0_84] : memref<8x640xf32, #tpu.memory_space<vmem>>, vector<8x640xf32>
      %c1_i32_85 = arith.constant 1 : i32
      %104 = vector.broadcast %c1_i32_85 : i32 to vector<8x640xi32>
      %105 = arith.cmpi eq, %19, %104 : vector<8x640xi32>
      %cst_86 = arith.constant 0.000000e+00 : f32
      %106 = vector.broadcast %cst_86 : f32 to vector<8x640xf32>
      %107 = arith.select %105, %103, %106 : vector<8x640xi1>, vector<8x640xf32>
      %108 = vector.shape_cast %107 : vector<8x640xf32> to vector<1x8x640xf32>
      %cst_87 = arith.constant dense<0.000000e+00> : vector<1xf32>
      %109 = vector.multi_reduction <add>, %108, %cst_87 [1, 2] : vector<1x8x640xf32> to vector<1xf32>
      %110 = vector.shape_cast %109 : vector<1xf32> to vector<1x1x1xf32>
      %111 = vector.extract %110[0, 0, 0] : f32 from vector<1x1x1xf32>
      %c0_88 = arith.constant 0 : index
      %112 = memref.load %arg3[%c0_88] : memref<16xf32, #tpu.memory_space<smem>>
      memref.store %111, %arg3[%c0_88] : memref<16xf32, #tpu.memory_space<smem>>
      %c2_i32 = arith.constant 2 : i32
      %113 = vector.broadcast %c2_i32 : i32 to vector<8x640xi32>
      %114 = arith.cmpi eq, %19, %113 : vector<8x640xi32>
      %cst_89 = arith.constant 0.000000e+00 : f32
      %115 = vector.broadcast %cst_89 : f32 to vector<8x640xf32>
      %116 = arith.select %114, %103, %115 : vector<8x640xi1>, vector<8x640xf32>
      %117 = vector.shape_cast %116 : vector<8x640xf32> to vector<1x8x640xf32>
      %cst_90 = arith.constant dense<0.000000e+00> : vector<1xf32>
      %118 = vector.multi_reduction <add>, %117, %cst_90 [1, 2] : vector<1x8x640xf32> to vector<1xf32>
      %119 = vector.shape_cast %118 : vector<1xf32> to vector<1x1x1xf32>
      %120 = vector.extract %119[0, 0, 0] : f32 from vector<1x1x1xf32>
      %c1_91 = arith.constant 1 : index
      %121 = memref.load %arg3[%c1_91] : memref<16xf32, #tpu.memory_space<smem>>
      memref.store %120, %arg3[%c1_91] : memref<16xf32, #tpu.memory_space<smem>>
      %c3_i32 = arith.constant 3 : i32
      %122 = vector.broadcast %c3_i32 : i32 to vector<8x640xi32>
      %123 = arith.cmpi eq, %19, %122 : vector<8x640xi32>
      %cst_92 = arith.constant 0.000000e+00 : f32
      %124 = vector.broadcast %cst_92 : f32 to vector<8x640xf32>
      %125 = arith.select %123, %103, %124 : vector<8x640xi1>, vector<8x640xf32>
      %126 = vector.shape_cast %125 : vector<8x640xf32> to vector<1x8x640xf32>
      %cst_93 = arith.constant dense<0.000000e+00> : vector<1xf32>
      %127 = vector.multi_reduction <add>, %126, %cst_93 [1, 2] : vector<1x8x640xf32> to vector<1xf32>
      %128 = vector.shape_cast %127 : vector<1xf32> to vector<1x1x1xf32>
      %129 = vector.extract %128[0, 0, 0] : f32 from vector<1x1x1xf32>
      %c2_94 = arith.constant 2 : index
      %130 = memref.load %arg3[%c2_94] : memref<16xf32, #tpu.memory_space<smem>>
      memref.store %129, %arg3[%c2_94] : memref<16xf32, #tpu.memory_space<smem>>
      %c4_i32 = arith.constant 4 : i32
      %131 = vector.broadcast %c4_i32 : i32 to vector<8x640xi32>
      %132 = arith.cmpi eq, %19, %131 : vector<8x640xi32>
      %cst_95 = arith.constant 0.000000e+00 : f32
      %133 = vector.broadcast %cst_95 : f32 to vector<8x640xf32>
      %134 = arith.select %132, %103, %133 : vector<8x640xi1>, vector<8x640xf32>
      %135 = vector.shape_cast %134 : vector<8x640xf32> to vector<1x8x640xf32>
      %cst_96 = arith.constant dense<0.000000e+00> : vector<1xf32>
      %136 = vector.multi_reduction <add>, %135, %cst_96 [1, 2] : vector<1x8x640xf32> to vector<1xf32>
      %137 = vector.shape_cast %136 : vector<1xf32> to vector<1x1x1xf32>
      %138 = vector.extract %137[0, 0, 0] : f32 from vector<1x1x1xf32>
      %c3_97 = arith.constant 3 : index
      %139 = memref.load %arg3[%c3_97] : memref<16xf32, #tpu.memory_space<smem>>
      memref.store %138, %arg3[%c3_97] : memref<16xf32, #tpu.memory_space<smem>>
      %c0_98 = arith.constant 0 : index
      %c0_99 = arith.constant 0 : index
      %c0_100 = arith.constant 0 : index
      %140 = vector.load %arg5[%c0_98, %c0_99, %c0_100] : memref<4x8x640xf32, #tpu.memory_space<vmem>>, vector<1x8x640xf32>
      %141 = vector.shape_cast %140 : vector<1x8x640xf32> to vector<8x640xf32>
      %142 = vector.shape_cast %141 : vector<8x640xf32> to vector<1x8x640xf32>
      %cst_101 = arith.constant dense<0.000000e+00> : vector<1xf32>
      %143 = vector.multi_reduction <add>, %142, %cst_101 [1, 2] : vector<1x8x640xf32> to vector<1xf32>
      %144 = vector.shape_cast %143 : vector<1xf32> to vector<1x1x1xf32>
      %145 = vector.extract %144[0, 0, 0] : f32 from vector<1x1x1xf32>
      %c4 = arith.constant 4 : index
      %146 = memref.load %arg3[%c4] : memref<16xf32, #tpu.memory_space<smem>>
      memref.store %145, %arg3[%c4] : memref<16xf32, #tpu.memory_space<smem>>
      %c1_102 = arith.constant 1 : index
      %c0_103 = arith.constant 0 : index
      %c0_104 = arith.constant 0 : index
      %147 = vector.load %arg5[%c1_102, %c0_103, %c0_104] : memref<4x8x640xf32, #tpu.memory_space<vmem>>, vector<1x8x640xf32>
      %148 = vector.shape_cast %147 : vector<1x8x640xf32> to vector<8x640xf32>
      %149 = vector.shape_cast %148 : vector<8x640xf32> to vector<1x8x640xf32>
      %cst_105 = arith.constant dense<0.000000e+00> : vector<1xf32>
      %150 = vector.multi_reduction <add>, %149, %cst_105 [1, 2] : vector<1x8x640xf32> to vector<1xf32>
      %151 = vector.shape_cast %150 : vector<1xf32> to vector<1x1x1xf32>
      %152 = vector.extract %151[0, 0, 0] : f32 from vector<1x1x1xf32>
      %c5 = arith.constant 5 : index
      %153 = memref.load %arg3[%c5] : memref<16xf32, #tpu.memory_space<smem>>
      memref.store %152, %arg3[%c5] : memref<16xf32, #tpu.memory_space<smem>>
      %c2_106 = arith.constant 2 : index
      %c0_107 = arith.constant 0 : index
      %c0_108 = arith.constant 0 : index
      %154 = vector.load %arg5[%c2_106, %c0_107, %c0_108] : memref<4x8x640xf32, #tpu.memory_space<vmem>>, vector<1x8x640xf32>
      %155 = vector.shape_cast %154 : vector<1x8x640xf32> to vector<8x640xf32>
      %156 = vector.shape_cast %155 : vector<8x640xf32> to vector<1x8x640xf32>
      %cst_109 = arith.constant dense<0.000000e+00> : vector<1xf32>
      %157 = vector.multi_reduction <add>, %156, %cst_109 [1, 2] : vector<1x8x640xf32> to vector<1xf32>
      %158 = vector.shape_cast %157 : vector<1xf32> to vector<1x1x1xf32>
      %159 = vector.extract %158[0, 0, 0] : f32 from vector<1x1x1xf32>
      %c6 = arith.constant 6 : index
      %160 = memref.load %arg3[%c6] : memref<16xf32, #tpu.memory_space<smem>>
      memref.store %159, %arg3[%c6] : memref<16xf32, #tpu.memory_space<smem>>
      %c3_110 = arith.constant 3 : index
      %c0_111 = arith.constant 0 : index
      %c0_112 = arith.constant 0 : index
      %161 = vector.load %arg5[%c3_110, %c0_111, %c0_112] : memref<4x8x640xf32, #tpu.memory_space<vmem>>, vector<1x8x640xf32>
      %162 = vector.shape_cast %161 : vector<1x8x640xf32> to vector<8x640xf32>
      %163 = vector.shape_cast %162 : vector<8x640xf32> to vector<1x8x640xf32>
      %cst_113 = arith.constant dense<0.000000e+00> : vector<1xf32>
      %164 = vector.multi_reduction <add>, %163, %cst_113 [1, 2] : vector<1x8x640xf32> to vector<1xf32>
      %165 = vector.shape_cast %164 : vector<1xf32> to vector<1x1x1xf32>
      %166 = vector.extract %165[0, 0, 0] : f32 from vector<1x1x1xf32>
      %c7 = arith.constant 7 : index
      %167 = memref.load %arg3[%c7] : memref<16xf32, #tpu.memory_space<smem>>
      memref.store %166, %arg3[%c7] : memref<16xf32, #tpu.memory_space<smem>>
      %c0_114 = arith.constant 0 : index
      %c0_115 = arith.constant 0 : index
      %c0_116 = arith.constant 0 : index
      %168 = vector.load %arg6[%c0_114, %c0_115, %c0_116] : memref<2x8x640xf32, #tpu.memory_space<vmem>>, vector<1x8x640xf32>
      %169 = vector.shape_cast %168 : vector<1x8x640xf32> to vector<8x640xf32>
      %170 = vector.shape_cast %169 : vector<8x640xf32> to vector<1x8x640xf32>
      %cst_117 = arith.constant dense<0xFF800000> : vector<1xf32>
      %171 = vector.multi_reduction <maximumf>, %170, %cst_117 [1, 2] : vector<1x8x640xf32> to vector<1xf32>
      %172 = vector.shape_cast %171 : vector<1xf32> to vector<1x1x1xf32>
      %173 = vector.extract %172[0, 0, 0] : f32 from vector<1x1x1xf32>
      %174 = vector.broadcast %173 : f32 to vector<8x640xf32>
      %175 = arith.subf %169, %174 : vector<8x640xf32>
      %176 = math.exp %175 : vector<8x640xf32>
      %c0_118 = arith.constant 0 : index
      %c0_119 = arith.constant 0 : index
      %c0_120 = arith.constant 0 : index
      %177 = vector.load %arg7[%c0_118, %c0_119, %c0_120] : memref<4x8x640xf32, #tpu.memory_space<vmem>>, vector<1x8x640xf32>
      %178 = vector.shape_cast %177 : vector<1x8x640xf32> to vector<8x640xf32>
      %179 = arith.mulf %178, %176 : vector<8x640xf32>
      %180 = vector.shape_cast %179 : vector<8x640xf32> to vector<1x8x640xf32>
      %cst_121 = arith.constant dense<0.000000e+00> : vector<1xf32>
      %181 = vector.multi_reduction <add>, %180, %cst_121 [1, 2] : vector<1x8x640xf32> to vector<1xf32>
      %182 = vector.shape_cast %181 : vector<1xf32> to vector<1x1x1xf32>
      %183 = vector.extract %182[0, 0, 0] : f32 from vector<1x1x1xf32>
      %c8 = arith.constant 8 : index
      %184 = memref.load %arg3[%c8] : memref<16xf32, #tpu.memory_space<smem>>
      memref.store %183, %arg3[%c8] : memref<16xf32, #tpu.memory_space<smem>>
      %c1_122 = arith.constant 1 : index
      %c0_123 = arith.constant 0 : index
      %c0_124 = arith.constant 0 : index
      %185 = vector.load %arg7[%c1_122, %c0_123, %c0_124] : memref<4x8x640xf32, #tpu.memory_space<vmem>>, vector<1x8x640xf32>
      %186 = vector.shape_cast %185 : vector<1x8x640xf32> to vector<8x640xf32>
      %187 = arith.mulf %186, %176 : vector<8x640xf32>
      %188 = vector.shape_cast %187 : vector<8x640xf32> to vector<1x8x640xf32>
      %cst_125 = arith.constant dense<0.000000e+00> : vector<1xf32>
      %189 = vector.multi_reduction <add>, %188, %cst_125 [1, 2] : vector<1x8x640xf32> to vector<1xf32>
      %190 = vector.shape_cast %189 : vector<1xf32> to vector<1x1x1xf32>
      %191 = vector.extract %190[0, 0, 0] : f32 from vector<1x1x1xf32>
      %c9 = arith.constant 9 : index
      %192 = memref.load %arg3[%c9] : memref<16xf32, #tpu.memory_space<smem>>
      memref.store %191, %arg3[%c9] : memref<16xf32, #tpu.memory_space<smem>>
      %c12 = arith.constant 12 : index
      %193 = memref.load %arg3[%c12] : memref<16xf32, #tpu.memory_space<smem>>
      memref.store %173, %arg3[%c12] : memref<16xf32, #tpu.memory_space<smem>>
      %c1_126 = arith.constant 1 : index
      %c0_127 = arith.constant 0 : index
      %c0_128 = arith.constant 0 : index
      %194 = vector.load %arg6[%c1_126, %c0_127, %c0_128] : memref<2x8x640xf32, #tpu.memory_space<vmem>>, vector<1x8x640xf32>
      %195 = vector.shape_cast %194 : vector<1x8x640xf32> to vector<8x640xf32>
      %196 = vector.shape_cast %195 : vector<8x640xf32> to vector<1x8x640xf32>
      %cst_129 = arith.constant dense<0xFF800000> : vector<1xf32>
      %197 = vector.multi_reduction <maximumf>, %196, %cst_129 [1, 2] : vector<1x8x640xf32> to vector<1xf32>
      %198 = vector.shape_cast %197 : vector<1xf32> to vector<1x1x1xf32>
      %199 = vector.extract %198[0, 0, 0] : f32 from vector<1x1x1xf32>
      %200 = vector.broadcast %199 : f32 to vector<8x640xf32>
      %201 = arith.subf %195, %200 : vector<8x640xf32>
      %202 = math.exp %201 : vector<8x640xf32>
      %c2_130 = arith.constant 2 : index
      %c0_131 = arith.constant 0 : index
      %c0_132 = arith.constant 0 : index
      %203 = vector.load %arg7[%c2_130, %c0_131, %c0_132] : memref<4x8x640xf32, #tpu.memory_space<vmem>>, vector<1x8x640xf32>
      %204 = vector.shape_cast %203 : vector<1x8x640xf32> to vector<8x640xf32>
      %205 = arith.mulf %204, %202 : vector<8x640xf32>
      %206 = vector.shape_cast %205 : vector<8x640xf32> to vector<1x8x640xf32>
      %cst_133 = arith.constant dense<0.000000e+00> : vector<1xf32>
      %207 = vector.multi_reduction <add>, %206, %cst_133 [1, 2] : vector<1x8x640xf32> to vector<1xf32>
      %208 = vector.shape_cast %207 : vector<1xf32> to vector<1x1x1xf32>
      %209 = vector.extract %208[0, 0, 0] : f32 from vector<1x1x1xf32>
      %c10 = arith.constant 10 : index
      %210 = memref.load %arg3[%c10] : memref<16xf32, #tpu.memory_space<smem>>
      memref.store %209, %arg3[%c10] : memref<16xf32, #tpu.memory_space<smem>>
      %c3_134 = arith.constant 3 : index
      %c0_135 = arith.constant 0 : index
      %c0_136 = arith.constant 0 : index
      %211 = vector.load %arg7[%c3_134, %c0_135, %c0_136] : memref<4x8x640xf32, #tpu.memory_space<vmem>>, vector<1x8x640xf32>
      %212 = vector.shape_cast %211 : vector<1x8x640xf32> to vector<8x640xf32>
      %213 = arith.mulf %212, %202 : vector<8x640xf32>
      %214 = vector.shape_cast %213 : vector<8x640xf32> to vector<1x8x640xf32>
      %cst_137 = arith.constant dense<0.000000e+00> : vector<1xf32>
      %215 = vector.multi_reduction <add>, %214, %cst_137 [1, 2] : vector<1x8x640xf32> to vector<1xf32>
      %216 = vector.shape_cast %215 : vector<1xf32> to vector<1x1x1xf32>
      %217 = vector.extract %216[0, 0, 0] : f32 from vector<1x1x1xf32>
      %c11 = arith.constant 11 : index
      %218 = memref.load %arg3[%c11] : memref<16xf32, #tpu.memory_space<smem>>
      memref.store %217, %arg3[%c11] : memref<16xf32, #tpu.memory_space<smem>>
      %c13 = arith.constant 13 : index
      %219 = memref.load %arg3[%c13] : memref<16xf32, #tpu.memory_space<smem>>
      memref.store %199, %arg3[%c13] : memref<16xf32, #tpu.memory_space<smem>>
      %cst_138 = arith.constant 0.000000e+00 : f32
      %c14 = arith.constant 14 : index
      %220 = memref.load %arg3[%c14] : memref<16xf32, #tpu.memory_space<smem>>
      memref.store %cst_138, %arg3[%c14] : memref<16xf32, #tpu.memory_space<smem>>
      %cst_139 = arith.constant 0.000000e+00 : f32
      %c15 = arith.constant 15 : index
      %221 = memref.load %arg3[%c15] : memref<16xf32, #tpu.memory_space<smem>>
      memref.store %cst_139, %arg3[%c15] : memref<16xf32, #tpu.memory_space<smem>>
    } else {
    }
    return
  }
  func.func @transform_0(%arg0: i32) -> (i32, i32) {
    %c0_i32 = arith.constant 0 : i32
    %c0_i32_0 = arith.constant 0 : i32
    return %arg0, %c0_i32 : i32, i32
  }
  func.func @transform_1(%arg0: i32) -> (i32, i32) {
    %c0_i32 = arith.constant 0 : i32
    %c0_i32_0 = arith.constant 0 : i32
    return %arg0, %c0_i32 : i32, i32
  }
  func.func @transform_2(%arg0: i32) -> i32 {
    %c0_i32 = arith.constant 0 : i32
    %c0_i32_0 = arith.constant 0 : i32
    return %c0_i32 : i32
  }
}

module attributes {stable_mosaic.version = 11 : i64} {
  func.func @kernel(%arg0: i32, %arg1: memref<1024x512xf32, #tpu.memory_space<vmem>>, %arg2: memref<1024x512xf32, #tpu.memory_space<vmem>>, %arg3: memref<1xf32, #tpu.memory_space<smem>>, %arg4: memref<8x512xf32, #tpu.memory_space<vmem>>) attributes {dimension_semantics = [#tpu.dimension_semantics<arbitrary>], iteration_bounds = array<i64: 1>, scalar_prefetch = 0 : i64, scratch_operands = 1 : i64, tpu.core_type = #tpu.core_type<tc>, window_params = [{transform_indices = @transform_0, window_bounds = array<i64: 1024, 512>}, {transform_indices = @transform_1, window_bounds = array<i64: 1024, 512>}, {transform_indices = @transform_2, window_bounds = array<i64: 1>}]} {
    %c0_i32 = arith.constant 0 : i32
    %0 = arith.cmpi eq, %arg0, %c0_i32 : i32
    %1 = arith.extui %0 : i1 to i32
    %c0_i32_0 = arith.constant 0 : i32
    %2 = arith.cmpi ne, %1, %c0_i32_0 : i32
    scf.if %2 {
      %cst_8 = arith.constant 0.000000e+00 : f32
      %12 = vector.broadcast %cst_8 : f32 to vector<8x512xf32>
      %c0_9 = arith.constant 0 : index
      %c0_10 = arith.constant 0 : index
      %13 = vector.load %arg4[%c0_9, %c0_10] : memref<8x512xf32, #tpu.memory_space<vmem>>, vector<8x512xf32>
      tpu.vector_store %arg4[%c0_9, %c0_10], %12 {strides = array<i32>} : memref<8x512xf32, #tpu.memory_space<vmem>>, vector<8x512xf32>,
    } else {
    }
    %c0 = arith.constant 0 : index
    %c0_1 = arith.constant 0 : index
    %3 = vector.load %arg4[%c0, %c0_1] : memref<8x512xf32, #tpu.memory_space<vmem>>, vector<8x512xf32>
    %cst = arith.constant 0.000000e+00 : f32
    %4 = vector.broadcast %cst : f32 to vector<8x512xf32>
    %c0_i32_2 = arith.constant 0 : i32
    %c128_i32 = arith.constant 128 : i32
    %5 = arith.addi %c0_i32_2, %c128_i32 : i32
    %c1_i32 = arith.constant 1 : i32
    %6 = scf.for %arg5 = %c0_i32_2 to %5 step %c1_i32 iter_args(%arg6 = %4) -> (vector<8x512xf32>)  : i32 {
      %c8_i32 = arith.constant 8 : i32
      %12 = arith.muli %arg5, %c8_i32 : i32
      %13 = tpu.assume_multiple %12, 8 : i32
      %14 = arith.index_cast %13 : i32 to index
      %c0_8 = arith.constant 0 : index
      %15 = vector.load %arg1[%14, %c0_8] : memref<1024x512xf32, #tpu.memory_space<vmem>>, vector<8x512xf32>
      %16 = arith.index_cast %13 : i32 to index
      %c0_9 = arith.constant 0 : index
      %17 = vector.load %arg2[%16, %c0_9] : memref<1024x512xf32, #tpu.memory_space<vmem>>, vector<8x512xf32>
      %18 = arith.subf %15, %17 : vector<8x512xf32>
      %19 = arith.mulf %18, %18 : vector<8x512xf32>
      %20 = arith.addf %arg6, %19 : vector<8x512xf32>
      scf.yield %20 : vector<8x512xf32>
    }
    %c128_i32_3 = arith.constant 128 : i32
    %7 = arith.addf %3, %6 : vector<8x512xf32>
    %c0_4 = arith.constant 0 : index
    %c0_5 = arith.constant 0 : index
    %8 = vector.load %arg4[%c0_4, %c0_5] : memref<8x512xf32, #tpu.memory_space<vmem>>, vector<8x512xf32>
    tpu.vector_store %arg4[%c0_4, %c0_5], %7 {strides = array<i32>} : memref<8x512xf32, #tpu.memory_space<vmem>>, vector<8x512xf32>,
    %c0_i32_6 = arith.constant 0 : i32
    %9 = arith.cmpi eq, %arg0, %c0_i32_6 : i32
    %10 = arith.extui %9 : i1 to i32
    %c0_i32_7 = arith.constant 0 : i32
    %11 = arith.cmpi ne, %10, %c0_i32_7 : i32
    scf.if %11 {
      %c0_8 = arith.constant 0 : index
      %c0_9 = arith.constant 0 : index
      %12 = vector.load %arg4[%c0_8, %c0_9] : memref<8x512xf32, #tpu.memory_space<vmem>>, vector<8x512xf32>
      %13 = vector.shape_cast %12 : vector<8x512xf32> to vector<1x8x512xf32>
      %cst_10 = arith.constant dense<0.000000e+00> : vector<1xf32>
      %14 = vector.multi_reduction <add>, %13, %cst_10 [1, 2] : vector<1x8x512xf32> to vector<1xf32>
      %15 = vector.shape_cast %14 : vector<1xf32> to vector<1x1x1xf32>
      %16 = vector.extract %15[0, 0, 0] : f32 from vector<1x1x1xf32>
      %c0_11 = arith.constant 0 : index
      %17 = memref.load %arg3[%c0_11] : memref<1xf32, #tpu.memory_space<smem>>
      memref.store %16, %arg3[%c0_11] : memref<1xf32, #tpu.memory_space<smem>>
    } else {
    }
    return
  }
  func.func @transform_0(%arg0: i32) -> (i32, i32) {
    %c0_i32 = arith.constant 0 : i32
    %c0_i32_0 = arith.constant 0 : i32
    return %arg0, %c0_i32 : i32, i32
  }
  func.func @transform_1(%arg0: i32) -> (i32, i32) {
    %c0_i32 = arith.constant 0 : i32
    %c0_i32_0 = arith.constant 0 : i32
    return %arg0, %c0_i32 : i32, i32
  }
  func.func @transform_2(%arg0: i32) -> i32 {
    %c0_i32 = arith.constant 0 : i32
    %c0_i32_0 = arith.constant 0 : i32
    return %c0_i32 : i32
  }
}

</mosaic_0001>

<llo_original>
// kernel: loss_dr_forward.2
$region0: #{loss_dr_forward.2}
  #allocation0 [shape = 'u32[]', space=smem, size = 0x4, offset = 0x4, fixed_abs, tag = 'smem constant byte address 0x4 - core index']
  #allocation1 [shape = 'u32[72,128]{1,0:T(1,128)}', space=vmem, size = 0x9000, scoped, tag = 'internal scratch']
  #allocation2 [shape = 'f32[8,640]{1,0:T(8,128)}', space=vmem, size = 0x5000, scoped, tag = 'scratch operand']
  #allocation3 [shape = 'f32[4,8,640]{2,1,0:T(8,128)}', space=vmem, size = 0x14000, scoped, tag = 'scratch operand']
  #allocation4 [shape = 'f32[2,8,640]{2,1,0:T(8,128)}', space=vmem, size = 0xa000, scoped, tag = 'scratch operand']
  #allocation5 [shape = 'f32[4,8,640]{2,1,0:T(8,128)}', space=vmem, size = 0x14000, scoped, tag = 'scratch operand']
  %s0 = inlined_call_operand.vmem [shape: f32[2048,640], index: 0, kind: input, shape index: {}]
  %s1 = inlined_call_operand.vmem [shape: f32[2048,640], index: 1, kind: input, shape index: {}]
  %s2 = inlined_call_operand.vmem [shape: f32[16], index: 2, kind: output, shape index: {}]
  %s3 = sld [smem:[#allocation0]]
  $region63: #{loss_dr_forward.2} parent=0
    _
  %s5 = ssub.s32 1, %s3
  %s6 = scalar_select 0, %s5, %s3
  $region1: #{loss_dr_forward.2} parent=0
    #allocation6 [shape = 'u8[512]{0}', space=smem, size = 0x200, scoped, tag = 'output window, operand 0, single buffered']
    #allocation7 [shape = 's32[2]{0}', space=sflag, size = 0x8, scoped, tag = 'scoped memory for loss_dr_forward.2']
    %7 = vsyncpa [#allocation7], 0
    loop: start=0, step=1, limit=4
    $region2: #{loss_dr_forward.2} parent=1 // loop_pre_header
      _
    $region3: #{loss_dr_forward.2} parent=1 // loop_header
      %s9 = sphi 0, %s13
      %p10 = scmp.ge.s32.totalorder %s9, 4
      %s19 = sphi 0, %s21
      %s22 = sphi 0, %s19
      %s23 = sphi 0, %s22
      %s39 = sphi 0, %s23
      %s45 = sphi 0, %s47
      %s48 = sphi 0, %s45
      %s49 = sphi 0, %s48
      %s65 = sphi 0, %s49
      %s69 = sphi 0, %s69
      %s71 = sphi 0, %s69
      %s72 = sphi 0, %s71
      %s86 = sphi 0, %s72
    $region4: #{loss_dr_forward.2} parent=1 // loop_header_branch
      %12 = sbr.rel (%p10) target = $region8
    $region5: #{loss_dr_forward.2} parent=1 // loop_body
      %s14 = ssub.s32 %s9, 1
      %s15 = ssub.s32 %s9, 2
      %s16 = sadd.s32 %s9, 1
      %s17 = ssub.s32 %s9, %s16
      %p18 = scmp.eq.s32.totalorder %s17, 0
      %s20 = sadd.s32 %s19, 1
      %s21 = scalar_select %p18, %s19, %s20
      %p24 = pneg %p18
      %p25 = scmp.eq.s32.totalorder %s9, 1
      %p26 = por %p24, %p25
      %p27 = scmp.ne.s32.totalorder %s19, %s22
      %p28 = scmp.eq.s32.totalorder %s9, 0
      %p29 = por %p27, %p28
      %p30 = scmp.ne.s32.totalorder %s19, %s22
      %p31 = scmp.eq.s32.totalorder %s14, 1
      %p32 = por %p30, %p31
      %p33 = scmp.ne.s32.totalorder %s22, %s23
      %p34 = scmp.eq.s32.totalorder %s14, 0
      %p35 = por %p33, %p34
      %p36 = scmp.ne.s32.totalorder %s22, %s23
      %p37 = scmp.eq.s32.totalorder %s15, 1
      %p38 = por %p36, %p37
      %p40 = scmp.ne.s32.totalorder %s23, %s39
      %p41 = scmp.eq.s32.totalorder %s15, 0
      %p42 = por %p40, %p41
      %s43 = ssub.s32 %s9, %s16
      %p44 = scmp.eq.s32.totalorder %s43, 0
      %s46 = sadd.s32 %s45, 1
      %s47 = scalar_select %p44, %s45, %s46
      %p50 = pneg %p44
      %p51 = scmp.eq.s32.totalorder %s9, 1
      %p52 = por %p50, %p51
      %p53 = scmp.ne.s32.totalorder %s45, %s48
      %p54 = scmp.eq.s32.totalorder %s9, 0
      %p55 = por %p53, %p54
      %p56 = scmp.ne.s32.totalorder %s45, %s48
      %p57 = scmp.eq.s32.totalorder %s14, 1
      %p58 = por %p56, %p57
      %p59 = scmp.ne.s32.totalorder %s48, %s49
      %p60 = scmp.eq.s32.totalorder %s14, 0
      %p61 = por %p59, %p60
      %p62 = scmp.ne.s32.totalorder %s48, %s49
      %p63 = scmp.eq.s32.totalorder %s15, 1
      %p64 = por %p62, %p63
      %p66 = scmp.ne.s32.totalorder %s49, %s65
      %p67 = scmp.eq.s32.totalorder %s15, 0
      %p68 = por %p66, %p67
      %s70 = sadd.s32 %s69, 1
      %p73 = scmp.eq.s32.totalorder %s9, 1
      %p74 = scmp.ne.s32.totalorder %s69, %s71
      %p75 = scmp.eq.s32.totalorder %s9, 0
      %p76 = por %p74, %p75
      %p77 = scmp.ne.s32.totalorder %s69, %s71
      %p78 = scmp.eq.s32.totalorder %s14, 1
      %p79 = por %p77, %p78
      %p80 = scmp.ne.s32.totalorder %s71, %s72
      %p81 = scmp.eq.s32.totalorder %s14, 0
      %p82 = por %p80, %p81
      %p83 = scmp.ne.s32.totalorder %s71, %s72
      %p84 = scmp.eq.s32.totalorder %s15, 1
      %p85 = por %p83, %p84
      %p87 = scmp.ne.s32.totalorder %s72, %s86
      %p88 = scmp.eq.s32.totalorder %s15, 0
      %p89 = por %p87, %p88
      %p90 = scmp.le.s32.totalorder 1, %s9
      %p91 = scmp.lt.s32.totalorder %s9, 3
      %p92 = pnand %p90, %p91
      %p93 = pneg %p92
      // Predicated region
      $region9: #{loss_dr_forward.2} parent=5 // pred_check
        _
      $region10: #{loss_dr_forward.2} parent=5 // pred_check_branch
        %95 = sbr.rel (%p92) target = $region12
      $region11: #{loss_dr_forward.2} parent=5 // pred_region
        %s96 = ssub.s32 %s9, 1
      $region12: #{loss_dr_forward.2} parent=5 // pred_fallthru
        _
      %p97 = scmp.lt.s32.totalorder %s9, 2
      // Predicated region
      $region13: #{loss_dr_forward.2} parent=5 // pred_check
        %p98 = pneg %p97
      $region14: #{loss_dr_forward.2} parent=5 // pred_check_branch
        %100 = sbr.rel (%p98) target = $region16
      $region15: #{loss_dr_forward.2} parent=5 // pred_region
        // Predicated region
        $region17: #{loss_dr_forward.2} parent=15 // pred_check
          %p101 = pneg %p29
        $region18: #{loss_dr_forward.2} parent=15 // pred_check_branch
          %103 = sbr.rel (%p101) target = $region20
        $region19: #{loss_dr_forward.2} parent=15 // pred_region
          %s104 = smul.u32 128, %s9
          %p105 = scmp.lt.s32.totalorder %s104, 255
          %s106 = scalar_select %p105, %s104, 255
          %s107 = smul.addr %s106, 5
          %s108 = smul.addr %s107, 8
          %s109 = scalar_lea.vmem %s0, %s108
          %s110 = smul.u32 128, %s9
        $region20: #{loss_dr_forward.2} parent=15 // pred_fallthru
          _
        // Predicated region
        $region21: #{loss_dr_forward.2} parent=15 // pred_check
          %p111 = pneg %p55
        $region22: #{loss_dr_forward.2} parent=15 // pred_check_branch
          %113 = sbr.rel (%p111) target = $region24
        $region23: #{loss_dr_forward.2} parent=15 // pred_region
          %s114 = smul.u32 128, %s9
          %p115 = scmp.lt.s32.totalorder %s114, 255
          %s116 = scalar_select %p115, %s114, 255
          %s117 = smul.addr %s116, 5
          %s118 = smul.addr %s117, 8
          %s119 = scalar_lea.vmem %s1, %s118
          %s120 = smul.u32 128, %s9
        $region24: #{loss_dr_forward.2} parent=15 // pred_fallthru
          _
      $region16: #{loss_dr_forward.2} parent=5 // pred_fallthru
        _
      %p121 = scmp.le.s32.totalorder 1, %s9
      %p122 = scmp.lt.s32.totalorder %s9, 3
      %p123 = pnand %p121, %p122
      %p124 = pneg %p123
      // Predicated region
      $region25: #{loss_dr_forward.2} parent=5 // pred_check
        _
      $region26: #{loss_dr_forward.2} parent=5 // pred_check_branch
        %126 = sbr.rel (%p123) target = $region28
      $region27: #{loss_dr_forward.2} parent=5 // pred_region
        %s127 = ssub.s32 %s9, 1
        %s128 = smul.u32 128, %s14
        %p129 = scmp.lt.s32.totalorder %s128, 255
        %s130 = scalar_select %p129, %s128, 255
        %s131 = smul.addr %s130, 5
        %s132 = smul.addr %s131, 8
        %s133 = scalar_lea.vmem %s0, %s132
        %p134 = pneg %p35
        %p135 = pneg %p32
        %s136 = smul.u32 128, %s14
        %p137 = scmp.lt.s32.totalorder %s136, 255
        %s138 = scalar_select %p137, %s136, 255
        %s139 = smul.addr %s138, 5
        %s140 = smul.addr %s139, 8
        %s141 = scalar_lea.vmem %s1, %s140
        %p142 = pneg %p61
        %p143 = pneg %p58
        %p144 = pneg %p82
        %p145 = pneg %p79
        %s146 = smul.u32 128, %s14
        %p147 = scmp.lt.s32.totalorder %s146, 255
        %s148 = scalar_select %p147, %s146, 255
        %s149 = smul.addr %s148, 5
        %s150 = smul.addr %s149, 8
        %s151 = scalar_lea.vmem %s0, %s150
        %s152 = smul.u32 128, %s14
        %s153 = smul.u32 128, %s14
        %p154 = scmp.lt.s32.totalorder %s153, 255
        %s155 = scalar_select %p154, %s153, 255
        %s156 = smul.addr %s155, 5
        %s157 = smul.addr %s156, 8
        %s158 = scalar_lea.vmem %s1, %s157
        %s159 = smul.u32 128, %s14
        %p160 = scmp.eq.s32.totalorder %s14, 0
        // Predicated region
        $region29: #{loss_dr_forward.2} parent=27 // pred_check
          %p161 = pneg %p160
        $region30: #{loss_dr_forward.2} parent=27 // pred_check_branch
          %163 = sbr.rel (%p161) target = $region32
        $region31: #{loss_dr_forward.2} parent=27 // pred_region
          %164 = vst [vmem:[#allocation2] sm:$0xff] 0.0
          %165 = vst [vmem:[#allocation2 + $0x8] sm:$0xff] 0.0
          %166 = vst [vmem:[#allocation2 + $0x10] sm:$0xff] 0.0
          %167 = vst [vmem:[#allocation2 + $0x18] sm:$0xff] 0.0
          %168 = vst [vmem:[#allocation2 + $0x20] sm:$0xff] 0.0
          %169 = vst [vmem:[#allocation3] sm:$0xff] 0.0
          %170 = vst [vmem:[#allocation3 + $0x8] sm:$0xff] 0.0
          %171 = vst [vmem:[#allocation3 + $0x10] sm:$0xff] 0.0
          %172 = vst [vmem:[#allocation3 + $0x18] sm:$0xff] 0.0
          %173 = vst [vmem:[#allocation3 + $0x20] sm:$0xff] 0.0
          %174 = vst [vmem:[#allocation3 + $0x28] sm:$0xff] 0.0
          %175 = vst [vmem:[#allocation3 + $0x30] sm:$0xff] 0.0
          %176 = vst [vmem:[#allocation3 + $0x38] sm:$0xff] 0.0
          %177 = vst [vmem:[#allocation3 + $0x40] sm:$0xff] 0.0
          %178 = vst [vmem:[#allocation3 + $0x48] sm:$0xff] 0.0
          %179 = vst [vmem:[#allocation3 + $0x50] sm:$0xff] 0.0
          %180 = vst [vmem:[#allocation3 + $0x58] sm:$0xff] 0.0
          %181 = vst [vmem:[#allocation3 + $0x60] sm:$0xff] 0.0
          %182 = vst [vmem:[#allocation3 + $0x68] sm:$0xff] 0.0
          %183 = vst [vmem:[#allocation3 + $0x70] sm:$0xff] 0.0
          %184 = vst [vmem:[#allocation3 + $0x78] sm:$0xff] 0.0
          %185 = vst [vmem:[#allocation3 + $0x80] sm:$0xff] 0.0
          %186 = vst [vmem:[#allocation3 + $0x88] sm:$0xff] 0.0
          %187 = vst [vmem:[#allocation3 + $0x90] sm:$0xff] 0.0
          %188 = vst [vmem:[#allocation3 + $0x98] sm:$0xff] 0.0
          %189 = vst [vmem:[#allocation5] sm:$0xff] 0.0
          %190 = vst [vmem:[#allocation5 + $0x8] sm:$0xff] 0.0
          %191 = vst [vmem:[#allocation5 + $0x10] sm:$0xff] 0.0
          %192 = vst [vmem:[#allocation5 + $0x18] sm:$0xff] 0.0
          %193 = vst [vmem:[#allocation5 + $0x20] sm:$0xff] 0.0
          %194 = vst [vmem:[#allocation5 + $0x28] sm:$0xff] 0.0
          %195 = vst [vmem:[#allocation5 + $0x30] sm:$0xff] 0.0
          %196 = vst [vmem:[#allocation5 + $0x38] sm:$0xff] 0.0
          %197 = vst [vmem:[#allocation5 + $0x40] sm:$0xff] 0.0
          %198 = vst [vmem:[#allocation5 + $0x48] sm:$0xff] 0.0
          %199 = vst [vmem:[#allocation5 + $0x50] sm:$0xff] 0.0
          %200 = vst [vmem:[#allocation5 + $0x58] sm:$0xff] 0.0
          %201 = vst [vmem:[#allocation5 + $0x60] sm:$0xff] 0.0
          %202 = vst [vmem:[#allocation5 + $0x68] sm:$0xff] 0.0
          %203 = vst [vmem:[#allocation5 + $0x70] sm:$0xff] 0.0
          %204 = vst [vmem:[#allocation5 + $0x78] sm:$0xff] 0.0
          %205 = vst [vmem:[#allocation5 + $0x80] sm:$0xff] 0.0
          %206 = vst [vmem:[#allocation5 + $0x88] sm:$0xff] 0.0
          %207 = vst [vmem:[#allocation5 + $0x90] sm:$0xff] 0.0
          %208 = vst [vmem:[#allocation5 + $0x98] sm:$0xff] 0.0
          %209 = vst [vmem:[#allocation4] sm:$0xff] -1e+30
          %210 = vst [vmem:[#allocation4 + $0x8] sm:$0xff] -1e+30
          %211 = vst [vmem:[#allocation4 + $0x10] sm:$0xff] -1e+30
          %212 = vst [vmem:[#allocation4 + $0x18] sm:$0xff] -1e+30
          %213 = vst [vmem:[#allocation4 + $0x20] sm:$0xff] -1e+30
          %214 = vst [vmem:[#allocation4 + $0x28] sm:$0xff] -1e+30
          %215 = vst [vmem:[#allocation4 + $0x30] sm:$0xff] -1e+30
          %216 = vst [vmem:[#allocation4 + $0x38] sm:$0xff] -1e+30
          %217 = vst [vmem:[#allocation4 + $0x40] sm:$0xff] -1e+30
          %218 = vst [vmem:[#allocation4 + $0x48] sm:$0xff] -1e+30
        $region32: #{loss_dr_forward.2} parent=27 // pred_fallthru
          _
        %v219 = vlaneseq
        %v220 = vand.u32 %v219, 127
        %v221 = vadd.s32 %v220, 128
        %v222 = vadd.s32 %v220, 256
        %v223 = vadd.s32 %v220, 384
        %v224 = vadd.s32 %v220, 512
        %vm225 = vcmp.lt.s32.totalorder %v220, 0
        %v226 = vsub.s32 0, %v220
        %v227 = vsel %vm225, %v226, %v220
        %v228 = vand.u32 %v227, 65535
        %v229 = vshrl.u32 %v227, 16
        %v231 = vmul.u32 %v228, 52429
        %v232 = vmul.u32 %v228, 52428
        %v233 = vmul.u32 %v229, 52429
        %v234 = vmul.u32 %v229, 52428
        %v235 = vshll.u32 %v232, 16
        %v236 = vshrl.u32 %v232, 16
        %v237 = vshll.u32 %v233, 16
        %v238 = vshrl.u32 %v233, 16
        %vm239 = vc.u32 %v231, %v235
        %v240 = vsel %vm239, 1, 0
        %v241 = vadd.s32 %v231, %v235
        %v242 = vadd.s32 %v234, %v240
        %vm243 = vc.u32 %v241, %v237
        %v244 = vsel %vm243, 1, 0
        %v245 = vadd.s32 %v241, %v237
        %v246 = vadd.s32 %v242, %v244
        %v247 = vadd.s32 %v246, %v236
        %v248 = vadd.s32 %v247, %v238
        %v249 = vshrl.u32 %v248, 2
        %v250 = vmul.u32 %v249, 5
        %v251 = vsub.s32 %v227, %v250
        %v252 = vsub.s32 0, %v251
        %v253 = vsel %vm225, %v252, %v251
        %vm254 = vcmp.lt.s32.totalorder %v221, 0
        %v255 = vsub.s32 0, %v221
        %v256 = vsel %vm254, %v255, %v221
        %v257 = vand.u32 %v256, 65535
        %v258 = vshrl.u32 %v256, 16
        %v260 = vmul.u32 %v257, 52429
        %v261 = vmul.u32 %v257, 52428
        %v262 = vmul.u32 %v258, 52429
        %v263 = vmul.u32 %v258, 52428
        %v264 = vshll.u32 %v261, 16
        %v265 = vshrl.u32 %v261, 16
        %v266 = vshll.u32 %v262, 16
        %v267 = vshrl.u32 %v262, 16
        %vm268 = vc.u32 %v260, %v264
        %v269 = vsel %vm268, 1, 0
        %v270 = vadd.s32 %v260, %v264
        %v271 = vadd.s32 %v263, %v269
        %vm272 = vc.u32 %v270, %v266
        %v273 = vsel %vm272, 1, 0
        %v274 = vadd.s32 %v270, %v266
        %v275 = vadd.s32 %v271, %v273
        %v276 = vadd.s32 %v275, %v265
        %v277 = vadd.s32 %v276, %v267
        %v278 = vshrl.u32 %v277, 2
        %v279 = vmul.u32 %v278, 5
        %v280 = vsub.s32 %v256, %v279
        %v281 = vsub.s32 0, %v280
        %v282 = vsel %vm254, %v281, %v280
        %vm283 = vcmp.lt.s32.totalorder %v222, 0
        %v284 = vsub.s32 0, %v222
        %v285 = vsel %vm283, %v284, %v222
        %v286 = vand.u32 %v285, 65535
        %v287 = vshrl.u32 %v285, 16
        %v289 = vmul.u32 %v286, 52429
        %v290 = vmul.u32 %v286, 52428
        %v291 = vmul.u32 %v287, 52429
        %v292 = vmul.u32 %v287, 52428
        %v293 = vshll.u32 %v290, 16
        %v294 = vshrl.u32 %v290, 16
        %v295 = vshll.u32 %v291, 16
        %v296 = vshrl.u32 %v291, 16
        %vm297 = vc.u32 %v289, %v293
        %v298 = vsel %vm297, 1, 0
        %v299 = vadd.s32 %v289, %v293
        %v300 = vadd.s32 %v292, %v298
        %vm301 = vc.u32 %v299, %v295
        %v302 = vsel %vm301, 1, 0
        %v303 = vadd.s32 %v299, %v295
        %v304 = vadd.s32 %v300, %v302
        %v305 = vadd.s32 %v304, %v294
        %v306 = vadd.s32 %v305, %v296
        %v307 = vshrl.u32 %v306, 2
        %v308 = vmul.u32 %v307, 5
        %v309 = vsub.s32 %v285, %v308
        %v310 = vsub.s32 0, %v309
        %v311 = vsel %vm283, %v310, %v309
        %vm312 = vcmp.lt.s32.totalorder %v223, 0
        %v313 = vsub.s32 0, %v223
        %v314 = vsel %vm312, %v313, %v223
        %v315 = vand.u32 %v314, 65535
        %v316 = vshrl.u32 %v314, 16
        %v318 = vmul.u32 %v315, 52429
        %v319 = vmul.u32 %v315, 52428
        %v320 = vmul.u32 %v316, 52429
        %v321 = vmul.u32 %v316, 52428
        %v322 = vshll.u32 %v319, 16
        %v323 = vshrl.u32 %v319, 16
        %v324 = vshll.u32 %v320, 16
        %v325 = vshrl.u32 %v320, 16
        %vm326 = vc.u32 %v318, %v322
        %v327 = vsel %vm326, 1, 0
        %v328 = vadd.s32 %v318, %v322
        %v329 = vadd.s32 %v321, %v327
        %vm330 = vc.u32 %v328, %v324
        %v331 = vsel %vm330, 1, 0
        %v332 = vadd.s32 %v328, %v324
        %v333 = vadd.s32 %v329, %v331
        %v334 = vadd.s32 %v333, %v323
        %v335 = vadd.s32 %v334, %v325
        %v336 = vshrl.u32 %v335, 2
        %v337 = vmul.u32 %v336, 5
        %v338 = vsub.s32 %v314, %v337
        %v339 = vsub.s32 0, %v338
        %v340 = vsel %vm312, %v339, %v338
        %vm341 = vcmp.lt.s32.totalorder %v224, 0
        %v342 = vsub.s32 0, %v224
        %v343 = vsel %vm341, %v342, %v224
        %v344 = vand.u32 %v343, 65535
        %v345 = vshrl.u32 %v343, 16
        %v347 = vmul.u32 %v344, 52429
        %v348 = vmul.u32 %v344, 52428
        %v349 = vmul.u32 %v345, 52429
        %v350 = vmul.u32 %v345, 52428
        %v351 = vshll.u32 %v348, 16
        %v352 = vshrl.u32 %v348, 16
        %v353 = vshll.u32 %v349, 16
        %v354 = vshrl.u32 %v349, 16
        %vm355 = vc.u32 %v347, %v351
        %v356 = vsel %vm355, 1, 0
        %v357 = vadd.s32 %v347, %v351
        %v358 = vadd.s32 %v350, %v356
        %vm359 = vc.u32 %v357, %v353
        %v360 = vsel %vm359, 1, 0
        %v361 = vadd.s32 %v357, %v353
        %v362 = vadd.s32 %v358, %v360
        %v363 = vadd.s32 %v362, %v352
        %v364 = vadd.s32 %v363, %v354
        %v365 = vshrl.u32 %v364, 2
        %v366 = vmul.u32 %v365, 5
        %v367 = vsub.s32 %v343, %v366
        %v368 = vsub.s32 0, %v367
        %v369 = vsel %vm341, %v368, %v367
        %vm370 = vcmp.ne.s32.totalorder %v253, 0
        %vm371 = vcmp.ne.s32.totalorder %v282, 0
        %vm372 = vcmp.ne.s32.totalorder %v311, 0
        %vm373 = vcmp.ne.s32.totalorder %v340, 0
        %vm374 = vcmp.ne.s32.totalorder %v369, 0
        %vm375 = vcmp.lt.s32.totalorder %v253, 0
        %vm376 = vcmp.lt.s32.totalorder %v282, 0
        %vm377 = vcmp.lt.s32.totalorder %v311, 0
        %vm378 = vcmp.lt.s32.totalorder %v340, 0
        %vm379 = vcmp.lt.s32.totalorder %v369, 0
        %vm380 = vmand %vm375, %vm370
        %vm381 = vmand %vm376, %vm371
        %vm382 = vmand %vm377, %vm372
        %vm383 = vmand %vm378, %vm373
        %vm384 = vmand %vm379, %vm374
        %v385 = vadd.s32 %v253, 5
        %v386 = vadd.s32 %v282, 5
        %v387 = vadd.s32 %v311, 5
        %v388 = vadd.s32 %v340, 5
        %v389 = vadd.s32 %v369, 5
        %v390 = vsel %vm380, %v385, %v253
        %v391 = vsel %vm381, %v386, %v282
        %v392 = vsel %vm382, %v387, %v311
        %v393 = vsel %vm383, %v388, %v340
        %v394 = vsel %vm384, %v389, %v369
        %vm395 = vcmp.eq.s32.totalorder %v390, 0
        %vm396 = vcmp.eq.s32.totalorder %v391, 0
        %vm397 = vcmp.eq.s32.totalorder %v392, 0
        %vm398 = vcmp.eq.s32.totalorder %v393, 0
        %vm399 = vcmp.eq.s32.totalorder %v394, 0
        %vm400 = vmxor %vm395, 1
        %vm401 = vmxor %vm396, 1
        %vm402 = vmxor %vm397, 1
        %vm403 = vmxor %vm398, 1
        %vm404 = vmxor %vm399, 1
        loop: start=0, step=1, limit=128
        $region33: #{loss_dr_forward.2} parent=27 // loop_pre_header
          _
        $region34: #{loss_dr_forward.2} parent=27 // loop_header
          %s406 = sphi 0, %s410
          %p407 = scmp.ge.s32.totalorder %s406, 128
          %v411 = vphi 0.0, %v625
          %v412 = vphi 0.0, %v626
          %v413 = vphi 0.0, %v627
          %v414 = vphi 0.0, %v628
          %v415 = vphi 0.0, %v629
          %v416 = vphi 0.0, %v645
          %v417 = vphi 0.0, %v646
          %v418 = vphi 0.0, %v647
          %v419 = vphi 0.0, %v648
          %v420 = vphi 0.0, %v649
          %v421 = vphi 0.0, %v660
          %v422 = vphi 0.0, %v661
          %v423 = vphi 0.0, %v662
          %v424 = vphi 0.0, %v663
          %v425 = vphi 0.0, %v664
          %v426 = vphi 0.0, %v680
          %v427 = vphi 0.0, %v681
          %v428 = vphi 0.0, %v682
          %v429 = vphi 0.0, %v683
          %v430 = vphi 0.0, %v684
          %v431 = vphi 0.0, %v705
          %v432 = vphi 0.0, %v706
          %v433 = vphi 0.0, %v707
          %v434 = vphi 0.0, %v708
          %v435 = vphi 0.0, %v709
          %v436 = vphi -1e+30, %v730
          %v437 = vphi -1e+30, %v731
          %v438 = vphi -1e+30, %v732
          %v439 = vphi -1e+30, %v733
          %v440 = vphi -1e+30, %v734
          %v441 = vphi -1e+30, %v735
          %v442 = vphi -1e+30, %v736
          %v443 = vphi -1e+30, %v737
          %v444 = vphi -1e+30, %v738
          %v445 = vphi -1e+30, %v739
        $region35: #{loss_dr_forward.2} parent=27 // loop_header_branch
          %409 = sbr.rel (%p407) target = $region39
        $region36: #{loss_dr_forward.2} parent=27 // loop_body
          %s446 = smul.u32 %s406, 8
          %s447 = sshra.s32 %s446, 3
          %s448 = sand.u32 %s446, 7
          %s449 = smul.u32 %s447, 5
          %s450 = smul.addr %s449, 8
          %s451 = scalar_lea.vmem %s151, %s450
          %v452 = vld [vmem:[%s451] sm:$0xff]
          %v453 = vld [vmem:[%s451 + $0x8] sm:$0xff]
          %v454 = vld [vmem:[%s451 + $0x10] sm:$0xff]
          %v455 = vld [vmem:[%s451 + $0x18] sm:$0xff]
          %v456 = vld [vmem:[%s451 + $0x20] sm:$0xff]
          %s457 = smul.addr %s449, 8
          %s458 = scalar_lea.vmem %s158, %s457
          %v459 = vld [vmem:[%s458] sm:$0xff]
          %v460 = vld [vmem:[%s458 + $0x8] sm:$0xff]
          %v461 = vld [vmem:[%s458 + $0x10] sm:$0xff]
          %v462 = vld [vmem:[%s458 + $0x18] sm:$0xff]
          %v463 = vld [vmem:[%s458 + $0x20] sm:$0xff]
          %v464 = vsel %vm395, %v459, 0.0
          %v465 = vsel %vm396, %v460, 0.0
          %v466 = vsel %vm397, %v461, 0.0
          %v467 = vsel %vm398, %v462, 0.0
          %v468 = vsel %vm399, %v463, 0.0
          %470 = vrot.lane.b32.xlu0 %v468, 1
          %v471 = vpop.permute.xlu0 %470
          %477 = vrot.lane.b32.xlu0 %v464, 1
          %v478 = vpop.permute.xlu0 %477
          %479 = vrot.lane.b32.xlu0 %v465, 1
          %v480 = vpop.permute.xlu0 %479
          %481 = vrot.lane.b32.xlu0 %v466, 1
          %v482 = vpop.permute.xlu0 %481
          %483 = vrot.lane.b32.xlu0 %v467, 1
          %v484 = vpop.permute.xlu0 %483
          %vm485 = vcmask 7168
          %v486 = vsel %vm485, %v478, %v480
          %v487 = vsel %vm485, %v480, %v482
          %v488 = vsel %vm485, %v482, %v484
          %v489 = vsel %vm485, %v484, %v471
          %v495 = vsel %vm485, %v471, %v478
          %v496 = vadd.f32 %v464, %v495
          %v497 = vadd.f32 %v465, %v486
          %v498 = vadd.f32 %v466, %v487
          %v499 = vadd.f32 %v467, %v488
          %v500 = vadd.f32 %v468, %v489
          %502 = vrot.lane.b32.xlu0 %v500, 2
          %v503 = vpop.permute.xlu0 %502
          %509 = vrot.lane.b32.xlu0 %v496, 2
          %v510 = vpop.permute.xlu0 %509
          %511 = vrot.lane.b32.xlu0 %v497, 2
          %v512 = vpop.permute.xlu0 %511
          %513 = vrot.lane.b32.xlu0 %v498, 2
          %v514 = vpop.permute.xlu0 %513
          %515 = vrot.lane.b32.xlu0 %v499, 2
          %v516 = vpop.permute.xlu0 %515
          %vm517 = vcmask 15360
          %v518 = vsel %vm517, %v510, %v512
          %v519 = vsel %vm517, %v512, %v514
          %v520 = vsel %vm517, %v514, %v516
          %v521 = vsel %vm517, %v516, %v503
          %v527 = vsel %vm517, %v503, %v510
          %v528 = vadd.f32 %v496, %v527
          %v529 = vadd.f32 %v497, %v518
          %v530 = vadd.f32 %v498, %v519
          %v531 = vadd.f32 %v499, %v520
          %v532 = vadd.f32 %v500, %v521
          %533 = vrot.lane.b32.xlu0 %v468, 4
          %v534 = vpop.permute.xlu0 %533
          %536 = vrot.lane.b32.xlu0 %v464, 4
          %v537 = vpop.permute.xlu0 %536
          %538 = vrot.lane.b32.xlu0 %v465, 4
          %v539 = vpop.permute.xlu0 %538
          %540 = vrot.lane.b32.xlu0 %v466, 4
          %v541 = vpop.permute.xlu0 %540
          %542 = vrot.lane.b32.xlu0 %v467, 4
          %v543 = vpop.permute.xlu0 %542
          %vm544 = vcmask 31744
          %v545 = vsel %vm544, %v537, %v539
          %v546 = vsel %vm544, %v539, %v541
          %v547 = vsel %vm544, %v541, %v543
          %v548 = vsel %vm544, %v543, %v534
          %v554 = vsel %vm544, %v534, %v537
          %v555 = vadd.f32 %v528, %v554
          %v556 = vadd.f32 %v529, %v545
          %v557 = vadd.f32 %v530, %v546
          %v558 = vadd.f32 %v531, %v547
          %v559 = vadd.f32 %v532, %v548
          %vm560 = vcmp.gt.f32.partialorder %v555, 0.5
          %vm561 = vcmp.gt.f32.partialorder %v556, 0.5
          %vm562 = vcmp.gt.f32.partialorder %v557, 0.5
          %vm563 = vcmp.gt.f32.partialorder %v558, 0.5
          %vm564 = vcmp.gt.f32.partialorder %v559, 0.5
          %vm565 = vcmp.lt.f32.partialorder %v555, -0.5
          %vm566 = vcmp.lt.f32.partialorder %v556, -0.5
          %vm567 = vcmp.lt.f32.partialorder %v557, -0.5
          %vm568 = vcmp.lt.f32.partialorder %v558, -0.5
          %vm569 = vcmp.lt.f32.partialorder %v559, -0.5
          %vm570 = vmand %vm560, %vm395
          %vm571 = vmand %vm561, %vm396
          %vm572 = vmand %vm562, %vm397
          %vm573 = vmand %vm563, %vm398
          %vm574 = vmand %vm564, %vm399
          %vm575 = vmand %vm565, %vm395
          %vm576 = vmand %vm566, %vm396
          %vm577 = vmand %vm567, %vm397
          %vm578 = vmand %vm568, %vm398
          %vm579 = vmand %vm569, %vm399
          %vm580 = vmand %vm560, %vm400
          %vm581 = vmand %vm561, %vm401
          %vm582 = vmand %vm562, %vm402
          %vm583 = vmand %vm563, %vm403
          %vm584 = vmand %vm564, %vm404
          %v585 = vsub.f32 %v452, %v459
          %v586 = vsub.f32 %v453, %v460
          %v587 = vsub.f32 %v454, %v461
          %v588 = vsub.f32 %v455, %v462
          %v589 = vsub.f32 %v456, %v463
          %v590 = vand.u32 2147483647, %v585
          %v591 = vand.u32 2147483647, %v586
          %v592 = vand.u32 2147483647, %v587
          %v593 = vand.u32 2147483647, %v588
          %v594 = vand.u32 2147483647, %v589
          %vm595 = vcmp.lt.f32.partialorder %v590, 1.0
          %vm596 = vcmp.lt.f32.partialorder %v591, 1.0
          %vm597 = vcmp.lt.f32.partialorder %v592, 1.0
          %vm598 = vcmp.lt.f32.partialorder %v593, 1.0
          %vm599 = vcmp.lt.f32.partialorder %v594, 1.0
          %v600 = vmul.f32 %v585, 0.5
          %v601 = vmul.f32 %v586, 0.5
          %v602 = vmul.f32 %v587, 0.5
          %v603 = vmul.f32 %v588, 0.5
          %v604 = vmul.f32 %v589, 0.5
          %v605 = vmul.f32 %v600, %v585
          %v606 = vmul.f32 %v601, %v586
          %v607 = vmul.f32 %v602, %v587
          %v608 = vmul.f32 %v603, %v588
          %v609 = vmul.f32 %v604, %v589
          %v610 = vsub.f32 %v590, 0.5
          %v611 = vsub.f32 %v591, 0.5
          %v612 = vsub.f32 %v592, 0.5
          %v613 = vsub.f32 %v593, 0.5
          %v614 = vsub.f32 %v594, 0.5
          %v615 = vsel %vm595, %v605, %v610
          %v616 = vsel %vm596, %v606, %v611
          %v617 = vsel %vm597, %v607, %v612
          %v618 = vsel %vm598, %v608, %v613
          %v619 = vsel %vm599, %v609, %v614
          %v620 = vsel %vm580, %v615, 0.0
          %v621 = vsel %vm581, %v616, 0.0
          %v622 = vsel %vm582, %v617, 0.0
          %v623 = vsel %vm583, %v618, 0.0
          %v624 = vsel %vm584, %v619, 0.0
          %v625 = vadd.f32 %v411, %v620
          %v626 = vadd.f32 %v412, %v621
          %v627 = vadd.f32 %v413, %v622
          %v628 = vadd.f32 %v414, %v623
          %v629 = vadd.f32 %v415, %v624
          %vm630 = vcmp.ge.f32.partialorder %v452, 0.5
          %vm631 = vcmp.ge.f32.partialorder %v453, 0.5
          %vm632 = vcmp.ge.f32.partialorder %v454, 0.5
          %vm633 = vcmp.ge.f32.partialorder %v455, 0.5
          %vm634 = vcmp.ge.f32.partialorder %v456, 0.5
          %v635 = vsel %vm570, 1, 0
          %v636 = vsel %vm571, 1, 0
          %v637 = vsel %vm572, 1, 0
          %v638 = vsel %vm573, 1, 0
          %v639 = vsel %vm574, 1, 0
          %v640 = vcvt.s32.f32 %v635
          %v641 = vcvt.s32.f32 %v636
          %v642 = vcvt.s32.f32 %v637
          %v643 = vcvt.s32.f32 %v638
          %v644 = vcvt.s32.f32 %v639
          %v645 = vadd.f32 %v416, %v640
          %v646 = vadd.f32 %v417, %v641
          %v647 = vadd.f32 %v418, %v642
          %v648 = vadd.f32 %v419, %v643
          %v649 = vadd.f32 %v420, %v644
          %v650 = vsel %vm575, 1, 0
          %v651 = vsel %vm576, 1, 0
          %v652 = vsel %vm577, 1, 0
          %v653 = vsel %vm578, 1, 0
          %v654 = vsel %vm579, 1, 0
          %v655 = vcvt.s32.f32 %v650
          %v656 = vcvt.s32.f32 %v651
          %v657 = vcvt.s32.f32 %v652
          %v658 = vcvt.s32.f32 %v653
          %v659 = vcvt.s32.f32 %v654
          %v660 = vadd.f32 %v421, %v655
          %v661 = vadd.f32 %v422, %v656
          %v662 = vadd.f32 %v423, %v657
          %v663 = vadd.f32 %v424, %v658
          %v664 = vadd.f32 %v425, %v659
          %vm665 = vmand %vm570, %vm630
          %vm666 = vmand %vm571, %vm631
          %vm667 = vmand %vm572, %vm632
          %vm668 = vmand %vm573, %vm633
          %vm669 = vmand %vm574, %vm634
          %v670 = vsel %vm665, 1, 0
          %v671 = vsel %vm666, 1, 0
          %v672 = vsel %vm667, 1, 0
          %v673 = vsel %vm668, 1, 0
          %v674 = vsel %vm669, 1, 0
          %v675 = vcvt.s32.f32 %v670
          %v676 = vcvt.s32.f32 %v671
          %v677 = vcvt.s32.f32 %v672
          %v678 = vcvt.s32.f32 %v673
          %v679 = vcvt.s32.f32 %v674
          %v680 = vadd.f32 %v426, %v675
          %v681 = vadd.f32 %v427, %v676
          %v682 = vadd.f32 %v428, %v677
          %v683 = vadd.f32 %v429, %v678
          %v684 = vadd.f32 %v430, %v679
          %vm685 = vmxor %vm630, 1
          %vm686 = vmxor %vm631, 1
          %vm687 = vmxor %vm632, 1
          %vm688 = vmxor %vm633, 1
          %vm689 = vmxor %vm634, 1
          %vm690 = vmand %vm575, %vm685
          %vm691 = vmand %vm576, %vm686
          %vm692 = vmand %vm577, %vm687
          %vm693 = vmand %vm578, %vm688
          %vm694 = vmand %vm579, %vm689
          %v695 = vsel %vm690, 1, 0
          %v696 = vsel %vm691, 1, 0
          %v697 = vsel %vm692, 1, 0
          %v698 = vsel %vm693, 1, 0
          %v699 = vsel %vm694, 1, 0
          %v700 = vcvt.s32.f32 %v695
          %v701 = vcvt.s32.f32 %v696
          %v702 = vcvt.s32.f32 %v697
          %v703 = vcvt.s32.f32 %v698
          %v704 = vcvt.s32.f32 %v699
          %v705 = vadd.f32 %v431, %v700
          %v706 = vadd.f32 %v432, %v701
          %v707 = vadd.f32 %v433, %v702
          %v708 = vadd.f32 %v434, %v703
          %v709 = vadd.f32 %v435, %v704
          %v710 = vmul.f32 %v452, 12.52763
          %v711 = vmul.f32 %v453, 12.52763
          %v712 = vmul.f32 %v454, 12.52763
          %v713 = vmul.f32 %v455, 12.52763
          %v714 = vmul.f32 %v456, 12.52763
          %v715 = vsel %vm575, %v710, -1e+30
          %v716 = vsel %vm576, %v711, -1e+30
          %v717 = vsel %vm577, %v712, -1e+30
          %v718 = vsel %vm578, %v713, -1e+30
          %v719 = vsel %vm579, %v714, -1e+30
          %v720 = vsub.f32 0.0, %v452
          %v721 = vsub.f32 0.0, %v453
          %v722 = vsub.f32 0.0, %v454
          %v723 = vsub.f32 0.0, %v455
          %v724 = vsub.f32 0.0, %v456
          %v725 = vsel %vm570, %v720, -1e+30
          %v726 = vsel %vm571, %v721, -1e+30
          %v727 = vsel %vm572, %v722, -1e+30
          %v728 = vsel %vm573, %v723, -1e+30
          %v729 = vsel %vm574, %v724, -1e+30
          %v730 = vmax.f32 %v436, %v715
          %v731 = vmax.f32 %v437, %v716
          %v732 = vmax.f32 %v438, %v717
          %v733 = vmax.f32 %v439, %v718
          %v734 = vmax.f32 %v440, %v719
          %v735 = vmax.f32 %v441, %v725
          %v736 = vmax.f32 %v442, %v726
          %v737 = vmax.f32 %v443, %v727
          %v738 = vmax.f32 %v444, %v728
          %v739 = vmax.f32 %v445, %v729
        $region37: #{loss_dr_forward.2} parent=27 // loop_footer
          %s410 = sadd.s32 1, %s406
        $region38: #{loss_dr_forward.2} parent=27 // loop_footer_branch
          %405 = sbr.rel target = $region34
        $region39: #{loss_dr_forward.2} parent=27 // loop_exit
          _
        %v740 = vld [vmem:[#allocation2] sm:$0xff]
        %v741 = vld [vmem:[#allocation2 + $0x8] sm:$0xff]
        %v742 = vld [vmem:[#allocation2 + $0x10] sm:$0xff]
        %v743 = vld [vmem:[#allocation2 + $0x18] sm:$0xff]
        %v744 = vld [vmem:[#allocation2 + $0x20] sm:$0xff]
        %v745 = vadd.f32 %v740, %v411
        %v746 = vadd.f32 %v741, %v412
        %v747 = vadd.f32 %v742, %v413
        %v748 = vadd.f32 %v743, %v414
        %v749 = vadd.f32 %v744, %v415
        %750 = vst [vmem:[#allocation2] sm:$0xff] %v745
        %751 = vst [vmem:[#allocation2 + $0x8] sm:$0xff] %v746
        %752 = vst [vmem:[#allocation2 + $0x10] sm:$0xff] %v747
        %753 = vst [vmem:[#allocation2 + $0x18] sm:$0xff] %v748
        %754 = vst [vmem:[#allocation2 + $0x20] sm:$0xff] %v749
        %v755 = vld [vmem:[#allocation3] sm:$0xff]
        %v756 = vld [vmem:[#allocation3 + $0x8] sm:$0xff]
        %v757 = vld [vmem:[#allocation3 + $0x10] sm:$0xff]
        %v758 = vld [vmem:[#allocation3 + $0x18] sm:$0xff]
        %v759 = vld [vmem:[#allocation3 + $0x20] sm:$0xff]
        %v760 = vadd.f32 %v755, %v416
        %v761 = vadd.f32 %v756, %v417
        %v762 = vadd.f32 %v757, %v418
        %v763 = vadd.f32 %v758, %v419
        %v764 = vadd.f32 %v759, %v420
        %765 = vst [vmem:[#allocation3] sm:$0xff] %v760
        %766 = vst [vmem:[#allocation3 + $0x8] sm:$0xff] %v761
        %767 = vst [vmem:[#allocation3 + $0x10] sm:$0xff] %v762
        %768 = vst [vmem:[#allocation3 + $0x18] sm:$0xff] %v763
        %769 = vst [vmem:[#allocation3 + $0x20] sm:$0xff] %v764
        %s770 = scalar_lea.vmem [#allocation3], 40
        %v771 = vld [vmem:[%s770] sm:$0xff]
        %v772 = vld [vmem:[%s770 + $0x8] sm:$0xff]
        %v773 = vld [vmem:[%s770 + $0x10] sm:$0xff]
        %v774 = vld [vmem:[%s770 + $0x18] sm:$0xff]
        %v775 = vld [vmem:[%s770 + $0x20] sm:$0xff]
        %v776 = vadd.f32 %v771, %v421
        %v777 = vadd.f32 %v772, %v422
        %v778 = vadd.f32 %v773, %v423
        %v779 = vadd.f32 %v774, %v424
        %v780 = vadd.f32 %v775, %v425
        %781 = vst [vmem:[%s770] sm:$0xff] %v776
        %782 = vst [vmem:[%s770 + $0x8] sm:$0xff] %v777
        %783 = vst [vmem:[%s770 + $0x10] sm:$0xff] %v778
        %784 = vst [vmem:[%s770 + $0x18] sm:$0xff] %v779
        %785 = vst [vmem:[%s770 + $0x20] sm:$0xff] %v780
        %s786 = scalar_lea.vmem [#allocation3], 80
        %v787 = vld [vmem:[%s786] sm:$0xff]
        %v788 = vld [vmem:[%s786 + $0x8] sm:$0xff]
        %v789 = vld [vmem:[%s786 + $0x10] sm:$0xff]
        %v790 = vld [vmem:[%s786 + $0x18] sm:$0xff]
        %v791 = vld [vmem:[%s786 + $0x20] sm:$0xff]
        %v792 = vadd.f32 %v787, %v426
        %v793 = vadd.f32 %v788, %v427
        %v794 = vadd.f32 %v789, %v428
        %v795 = vadd.f32 %v790, %v429
        %v796 = vadd.f32 %v791, %v430
        %797 = vst [vmem:[%s786] sm:$0xff] %v792
        %798 = vst [vmem:[%s786 + $0x8] sm:$0xff] %v793
        %799 = vst [vmem:[%s786 + $0x10] sm:$0xff] %v794
        %800 = vst [vmem:[%s786 + $0x18] sm:$0xff] %v795
        %801 = vst [vmem:[%s786 + $0x20] sm:$0xff] %v796
        %s802 = scalar_lea.vmem [#allocation3], 120
        %v803 = vld [vmem:[%s802] sm:$0xff]
        %v804 = vld [vmem:[%s802 + $0x8] sm:$0xff]
        %v805 = vld [vmem:[%s802 + $0x10] sm:$0xff]
        %v806 = vld [vmem:[%s802 + $0x18] sm:$0xff]
        %v807 = vld [vmem:[%s802 + $0x20] sm:$0xff]
        %v808 = vadd.f32 %v803, %v431
        %v809 = vadd.f32 %v804, %v432
        %v810 = vadd.f32 %v805, %v433
        %v811 = vadd.f32 %v806, %v434
        %v812 = vadd.f32 %v807, %v435
        %813 = vst [vmem:[%s802] sm:$0xff] %v808
        %814 = vst [vmem:[%s802 + $0x8] sm:$0xff] %v809
        %815 = vst [vmem:[%s802 + $0x10] sm:$0xff] %v810
        %816 = vst [vmem:[%s802 + $0x18] sm:$0xff] %v811
        %817 = vst [vmem:[%s802 + $0x20] sm:$0xff] %v812
        %v818 = vld [vmem:[#allocation4] sm:$0xff]
        %v819 = vld [vmem:[#allocation4 + $0x8] sm:$0xff]
        %v820 = vld [vmem:[#allocation4 + $0x10] sm:$0xff]
        %v821 = vld [vmem:[#allocation4 + $0x18] sm:$0xff]
        %v822 = vld [vmem:[#allocation4 + $0x20] sm:$0xff]
        %v823 = vmax.f32 %v818, %v436
        %v824 = vmax.f32 %v819, %v437
        %v825 = vmax.f32 %v820, %v438
        %v826 = vmax.f32 %v821, %v439
        %v827 = vmax.f32 %v822, %v440
        %s828 = scalar_lea.vmem [#allocation4], 40
        %v829 = vld [vmem:[%s828] sm:$0xff]
        %v830 = vld [vmem:[%s828 + $0x8] sm:$0xff]
        %v831 = vld [vmem:[%s828 + $0x10] sm:$0xff]
        %v832 = vld [vmem:[%s828 + $0x18] sm:$0xff]
        %v833 = vld [vmem:[%s828 + $0x20] sm:$0xff]
        %v834 = vmax.f32 %v829, %v441
        %v835 = vmax.f32 %v830, %v442
        %v836 = vmax.f32 %v831, %v443
        %v837 = vmax.f32 %v832, %v444
        %v838 = vmax.f32 %v833, %v445
        %v839 = vsub.f32 %v818, %v823
        %v840 = vsub.f32 %v819, %v824
        %v841 = vsub.f32 %v820, %v825
        %v842 = vsub.f32 %v821, %v826
        %v843 = vsub.f32 %v822, %v827
        %v844 = vmul.f32 %v839, 1.442695
        %v845 = vpow.pop %v844
        %v846 = vmul.f32 %v840, 1.442695
        %v847 = vpow.pop %v846
        %v848 = vmul.f32 %v841, 1.442695
        %v849 = vpow.pop %v848
        %v850 = vmul.f32 %v842, 1.442695
        %v851 = vpow.pop %v850
        %v852 = vmul.f32 %v843, 1.442695
        %v853 = vpow.pop %v852
        %v854 = vsub.f32 %v829, %v834
        %v855 = vsub.f32 %v830, %v835
        %v856 = vsub.f32 %v831, %v836
        %v857 = vsub.f32 %v832, %v837
        %v858 = vsub.f32 %v833, %v838
        %v859 = vmul.f32 %v854, 1.442695
        %v860 = vpow.pop %v859
        %v861 = vmul.f32 %v855, 1.442695
        %v862 = vpow.pop %v861
        %v863 = vmul.f32 %v856, 1.442695
        %v864 = vpow.pop %v863
        %v865 = vmul.f32 %v857, 1.442695
        %v866 = vpow.pop %v865
        %v867 = vmul.f32 %v858, 1.442695
        %v868 = vpow.pop %v867
        %869 = vst [vmem:[#allocation4] sm:$0xff] %v823
        %870 = vst [vmem:[#allocation4 + $0x8] sm:$0xff] %v824
        %871 = vst [vmem:[#allocation4 + $0x10] sm:$0xff] %v825
        %872 = vst [vmem:[#allocation4 + $0x18] sm:$0xff] %v826
        %873 = vst [vmem:[#allocation4 + $0x20] sm:$0xff] %v827
        %874 = vst [vmem:[%s828] sm:$0xff] %v834
        %875 = vst [vmem:[%s828 + $0x8] sm:$0xff] %v835
        %876 = vst [vmem:[%s828 + $0x10] sm:$0xff] %v836
        %877 = vst [vmem:[%s828 + $0x18] sm:$0xff] %v837
        %878 = vst [vmem:[%s828 + $0x20] sm:$0xff] %v838
        %v879 = vld [vmem:[#allocation5] sm:$0xff]
        %v880 = vld [vmem:[#allocation5 + $0x8] sm:$0xff]
        %v881 = vld [vmem:[#allocation5 + $0x10] sm:$0xff]
        %v882 = vld [vmem:[#allocation5 + $0x18] sm:$0xff]
        %v883 = vld [vmem:[#allocation5 + $0x20] sm:$0xff]
        %v884 = vmul.f32 %v879, %v845
        %v885 = vmul.f32 %v880, %v847
        %v886 = vmul.f32 %v881, %v849
        %v887 = vmul.f32 %v882, %v851
        %v888 = vmul.f32 %v883, %v853
        %s889 = scalar_lea.vmem [#allocation5], 40
        %v890 = vld [vmem:[%s889] sm:$0xff]
        %v891 = vld [vmem:[%s889 + $0x8] sm:$0xff]
        %v892 = vld [vmem:[%s889 + $0x10] sm:$0xff]
        %v893 = vld [vmem:[%s889 + $0x18] sm:$0xff]
        %v894 = vld [vmem:[%s889 + $0x20] sm:$0xff]
        %v895 = vmul.f32 %v890, %v845
        %v896 = vmul.f32 %v891, %v847
        %v897 = vmul.f32 %v892, %v849
        %v898 = vmul.f32 %v893, %v851
        %v899 = vmul.f32 %v894, %v853
        %s900 = scalar_lea.vmem [#allocation5], 80
        %v901 = vld [vmem:[%s900] sm:$0xff]
        %v902 = vld [vmem:[%s900 + $0x8] sm:$0xff]
        %v903 = vld [vmem:[%s900 + $0x10] sm:$0xff]
        %v904 = vld [vmem:[%s900 + $0x18] sm:$0xff]
        %v905 = vld [vmem:[%s900 + $0x20] sm:$0xff]
        %v906 = vmul.f32 %v901, %v860
        %v907 = vmul.f32 %v902, %v862
        %v908 = vmul.f32 %v903, %v864
        %v909 = vmul.f32 %v904, %v866
        %v910 = vmul.f32 %v905, %v868
        %s911 = scalar_lea.vmem [#allocation5], 120
        %v912 = vld [vmem:[%s911] sm:$0xff]
        %v913 = vld [vmem:[%s911 + $0x8] sm:$0xff]
        %v914 = vld [vmem:[%s911 + $0x10] sm:$0xff]
        %v915 = vld [vmem:[%s911 + $0x18] sm:$0xff]
        %v916 = vld [vmem:[%s911 + $0x20] sm:$0xff]
        %v917 = vmul.f32 %v912, %v860
        %v918 = vmul.f32 %v913, %v862
        %v919 = vmul.f32 %v914, %v864
        %v920 = vmul.f32 %v915, %v866
        %v921 = vmul.f32 %v916, %v868
        loop: start=0, step=1, limit=128
        $region40: #{loss_dr_forward.2} parent=27 // loop_pre_header
          _
        $region41: #{loss_dr_forward.2} parent=27 // loop_header
          %s923 = sphi 0, %s927
          %p924 = scmp.ge.s32.totalorder %s923, 128
          %v928 = vphi %v884, %v1041
          %v929 = vphi %v885, %v1042
          %v930 = vphi %v886, %v1043
          %v931 = vphi %v887, %v1044
          %v932 = vphi %v888, %v1045
          %v933 = vphi %v895, %v1051
          %v934 = vphi %v896, %v1052
          %v935 = vphi %v897, %v1053
          %v936 = vphi %v898, %v1054
          %v937 = vphi %v899, %v1055
          %v938 = vphi %v906, %v1056
          %v939 = vphi %v907, %v1057
          %v940 = vphi %v908, %v1058
          %v941 = vphi %v909, %v1059
          %v942 = vphi %v910, %v1060
          %v943 = vphi %v917, %v1066
          %v944 = vphi %v918, %v1067
          %v945 = vphi %v919, %v1068
          %v946 = vphi %v920, %v1069
          %v947 = vphi %v921, %v1070
        $region42: #{loss_dr_forward.2} parent=27 // loop_header_branch
          %926 = sbr.rel (%p924) target = $region46
        $region43: #{loss_dr_forward.2} parent=27 // loop_body
          %s948 = smul.u32 %s923, 8
          %s949 = sshra.s32 %s948, 3
          %s950 = sand.u32 %s948, 7
          %s951 = smul.u32 %s949, 5
          %s952 = smul.addr %s951, 8
          %s953 = scalar_lea.vmem %s151, %s952
          %v954 = vld [vmem:[%s953] sm:$0xff]
          %v955 = vld [vmem:[%s953 + $0x8] sm:$0xff]
          %v956 = vld [vmem:[%s953 + $0x10] sm:$0xff]
          %v957 = vld [vmem:[%s953 + $0x18] sm:$0xff]
          %v958 = vld [vmem:[%s953 + $0x20] sm:$0xff]
          %s959 = smul.addr %s951, 8
          %s960 = scalar_lea.vmem %s158, %s959
          %v961 = vld [vmem:[%s960] sm:$0xff]
          %v962 = vld [vmem:[%s960 + $0x8] sm:$0xff]
          %v963 = vld [vmem:[%s960 + $0x10] sm:$0xff]
          %v964 = vld [vmem:[%s960 + $0x18] sm:$0xff]
          %v965 = vld [vmem:[%s960 + $0x20] sm:$0xff]
          %vm966 = vcmp.gt.f32.partialorder %v961, 0.5
          %vm967 = vcmp.gt.f32.partialorder %v962, 0.5
          %vm968 = vcmp.gt.f32.partialorder %v963, 0.5
          %vm969 = vcmp.gt.f32.partialorder %v964, 0.5
          %vm970 = vcmp.gt.f32.partialorder %v965, 0.5
          %vm971 = vmand %vm395, %vm966
          %vm972 = vmand %vm396, %vm967
          %vm973 = vmand %vm397, %vm968
          %vm974 = vmand %vm398, %vm969
          %vm975 = vmand %vm399, %vm970
          %vm976 = vcmp.lt.f32.partialorder %v961, -0.5
          %vm977 = vcmp.lt.f32.partialorder %v962, -0.5
          %vm978 = vcmp.lt.f32.partialorder %v963, -0.5
          %vm979 = vcmp.lt.f32.partialorder %v964, -0.5
          %vm980 = vcmp.lt.f32.partialorder %v965, -0.5
          %vm981 = vmand %vm395, %vm976
          %vm982 = vmand %vm396, %vm977
          %vm983 = vmand %vm397, %vm978
          %vm984 = vmand %vm398, %vm979
          %vm985 = vmand %vm399, %vm980
          %v986 = vsel %vm395, %v954, 0.0
          %v987 = vsel %vm396, %v955, 0.0
          %v988 = vsel %vm397, %v956, 0.0
          %v989 = vsel %vm398, %v957, 0.0
          %v990 = vsel %vm399, %v958, 0.0
          %v991 = vmul.f32 %v954, 12.52763
          %v992 = vmul.f32 %v955, 12.52763
          %v993 = vmul.f32 %v956, 12.52763
          %v994 = vmul.f32 %v957, 12.52763
          %v995 = vmul.f32 %v958, 12.52763
          %v996 = vsel %vm981, %v991, -1e+30
          %v997 = vsel %vm982, %v992, -1e+30
          %v998 = vsel %vm983, %v993, -1e+30
          %v999 = vsel %vm984, %v994, -1e+30
          %v1000 = vsel %vm985, %v995, -1e+30
          %v1001 = vsub.f32 0.0, %v954
          %v1002 = vsub.f32 0.0, %v955
          %v1003 = vsub.f32 0.0, %v956
          %v1004 = vsub.f32 0.0, %v957
          %v1005 = vsub.f32 0.0, %v958
          %v1006 = vsel %vm971, %v1001, -1e+30
          %v1007 = vsel %vm972, %v1002, -1e+30
          %v1008 = vsel %vm973, %v1003, -1e+30
          %v1009 = vsel %vm974, %v1004, -1e+30
          %v1010 = vsel %vm975, %v1005, -1e+30
          %v1011 = vsub.f32 %v996, %v823
          %v1012 = vsub.f32 %v997, %v824
          %v1013 = vsub.f32 %v998, %v825
          %v1014 = vsub.f32 %v999, %v826
          %v1015 = vsub.f32 %v1000, %v827
          %v1016 = vmul.f32 %v1011, 1.442695
          %v1017 = vpow.pop %v1016
          %v1018 = vmul.f32 %v1012, 1.442695
          %v1019 = vpow.pop %v1018
          %v1020 = vmul.f32 %v1013, 1.442695
          %v1021 = vpow.pop %v1020
          %v1022 = vmul.f32 %v1014, 1.442695
          %v1023 = vpow.pop %v1022
          %v1024 = vmul.f32 %v1015, 1.442695
          %v1025 = vpow.pop %v1024
          %v1026 = vsub.f32 %v1006, %v834
          %v1027 = vsub.f32 %v1007, %v835
          %v1028 = vsub.f32 %v1008, %v836
          %v1029 = vsub.f32 %v1009, %v837
          %v1030 = vsub.f32 %v1010, %v838
          %v1031 = vmul.f32 %v1026, 1.442695
          %v1032 = vpow.pop %v1031
          %v1033 = vmul.f32 %v1027, 1.442695
          %v1034 = vpow.pop %v1033
          %v1035 = vmul.f32 %v1028, 1.442695
          %v1036 = vpow.pop %v1035
          %v1037 = vmul.f32 %v1029, 1.442695
          %v1038 = vpow.pop %v1037
          %v1039 = vmul.f32 %v1030, 1.442695
          %v1040 = vpow.pop %v1039
          %v1041 = vadd.f32 %v928, %v1017
          %v1042 = vadd.f32 %v929, %v1019
          %v1043 = vadd.f32 %v930, %v1021
          %v1044 = vadd.f32 %v931, %v1023
          %v1045 = vadd.f32 %v932, %v1025
          %v1046 = vmul.f32 %v1017, %v986
          %v1047 = vmul.f32 %v1019, %v987
          %v1048 = vmul.f32 %v1021, %v988
          %v1049 = vmul.f32 %v1023, %v989
          %v1050 = vmul.f32 %v1025, %v990
          %v1051 = vadd.f32 %v933, %v1046
          %v1052 = vadd.f32 %v934, %v1047
          %v1053 = vadd.f32 %v935, %v1048
          %v1054 = vadd.f32 %v936, %v1049
          %v1055 = vadd.f32 %v937, %v1050
          %v1056 = vadd.f32 %v938, %v1032
          %v1057 = vadd.f32 %v939, %v1034
          %v1058 = vadd.f32 %v940, %v1036
          %v1059 = vadd.f32 %v941, %v1038
          %v1060 = vadd.f32 %v942, %v1040
          %v1061 = vmul.f32 %v1032, %v986
          %v1062 = vmul.f32 %v1034, %v987
          %v1063 = vmul.f32 %v1036, %v988
          %v1064 = vmul.f32 %v1038, %v989
          %v1065 = vmul.f32 %v1040, %v990
          %v1066 = vadd.f32 %v943, %v1061
          %v1067 = vadd.f32 %v944, %v1062
          %v1068 = vadd.f32 %v945, %v1063
          %v1069 = vadd.f32 %v946, %v1064
          %v1070 = vadd.f32 %v947, %v1065
        $region44: #{loss_dr_forward.2} parent=27 // loop_footer
          %s927 = sadd.s32 1, %s923
        $region45: #{loss_dr_forward.2} parent=27 // loop_footer_branch
          %922 = sbr.rel target = $region41
        $region46: #{loss_dr_forward.2} parent=27 // loop_exit
          _
        %1071 = vst [vmem:[#allocation5] sm:$0xff] %v928
        %1072 = vst [vmem:[#allocation5 + $0x8] sm:$0xff] %v929
        %1073 = vst [vmem:[#allocation5 + $0x10] sm:$0xff] %v930
        %1074 = vst [vmem:[#allocation5 + $0x18] sm:$0xff] %v931
        %1075 = vst [vmem:[#allocation5 + $0x20] sm:$0xff] %v932
        %1076 = vst [vmem:[%s889] sm:$0xff] %v933
        %1077 = vst [vmem:[%s889 + $0x8] sm:$0xff] %v934
        %1078 = vst [vmem:[%s889 + $0x10] sm:$0xff] %v935
        %1079 = vst [vmem:[%s889 + $0x18] sm:$0xff] %v936
        %1080 = vst [vmem:[%s889 + $0x20] sm:$0xff] %v937
        %1081 = vst [vmem:[%s900] sm:$0xff] %v938
        %1082 = vst [vmem:[%s900 + $0x8] sm:$0xff] %v939
        %1083 = vst [vmem:[%s900 + $0x10] sm:$0xff] %v940
        %1084 = vst [vmem:[%s900 + $0x18] sm:$0xff] %v941
        %1085 = vst [vmem:[%s900 + $0x20] sm:$0xff] %v942
        %1086 = vst [vmem:[%s911] sm:$0xff] %v943
        %1087 = vst [vmem:[%s911 + $0x8] sm:$0xff] %v944
        %1088 = vst [vmem:[%s911 + $0x10] sm:$0xff] %v945
        %1089 = vst [vmem:[%s911 + $0x18] sm:$0xff] %v946
        %1090 = vst [vmem:[%s911 + $0x20] sm:$0xff] %v947
        %p1091 = scmp.eq.s32.totalorder %s14, 1
        // Predicated region
        $region47: #{loss_dr_forward.2} parent=27 // pred_check
          %p1092 = pneg %p1091
        $region48: #{loss_dr_forward.2} parent=27 // pred_check_branch
          %1094 = sbr.rel (%p1092) target = $region50
        $region49: #{loss_dr_forward.2} parent=27 // pred_region
          %v1095 = vld [vmem:[#allocation2] sm:$0xff]
          %v1096 = vld [vmem:[#allocation2 + $0x8] sm:$0xff]
          %v1097 = vld [vmem:[#allocation2 + $0x10] sm:$0xff]
          %v1098 = vld [vmem:[#allocation2 + $0x18] sm:$0xff]
          %v1099 = vld [vmem:[#allocation2 + $0x20] sm:$0xff]
          %vm1100 = vcmp.eq.s32.totalorder %v390, 1
          %vm1101 = vcmp.eq.s32.totalorder %v391, 1
          %vm1102 = vcmp.eq.s32.totalorder %v392, 1
          %vm1103 = vcmp.eq.s32.totalorder %v393, 1
          %vm1104 = vcmp.eq.s32.totalorder %v394, 1
          %v1105 = vsel %vm1100, %v1095, 0.0
          %v1106 = vsel %vm1101, %v1096, 0.0
          %v1107 = vsel %vm1102, %v1097, 0.0
          %v1108 = vsel %vm1103, %v1098, 0.0
          %v1109 = vsel %vm1104, %v1099, 0.0
          %v1110 = vadd.f32 %v1105, %v1106
          %v1111 = vadd.f32 %v1110, %v1107
          %v1112 = vadd.f32 %v1111, %v1108
          %v1113 = vadd.f32 %v1112, %v1109
          %1114 = vadd.xlane.f32.xlu0 %v1113
          %v1115 = vpop.xlane.xlu0 %1114
          %v1116 = vrot.slane %v1115, 4
          %v1117 = vadd.f32 %v1115, %v1116
          %v1118 = vrot.slane %v1117, 2
          %v1119 = vadd.f32 %v1117, %v1118
          %v1120 = vrot.slane %v1119, 1
          %v1121 = vadd.f32 %v1119, %v1120
          %s1122 = vtos %v1121
          %s1123 = scalar_lea.smem [#allocation6], 0
          %1124 = sst [smem:[%s1123]] %s1122
          %vm1125 = vcmp.eq.s32.totalorder %v390, 2
          %vm1126 = vcmp.eq.s32.totalorder %v391, 2
          %vm1127 = vcmp.eq.s32.totalorder %v392, 2
          %vm1128 = vcmp.eq.s32.totalorder %v393, 2
          %vm1129 = vcmp.eq.s32.totalorder %v394, 2
          %v1130 = vsel %vm1125, %v1095, 0.0
          %v1131 = vsel %vm1126, %v1096, 0.0
          %v1132 = vsel %vm1127, %v1097, 0.0
          %v1133 = vsel %vm1128, %v1098, 0.0
          %v1134 = vsel %vm1129, %v1099, 0.0
          %v1135 = vadd.f32 %v1130, %v1131
          %v1136 = vadd.f32 %v1135, %v1132
          %v1137 = vadd.f32 %v1136, %v1133
          %v1138 = vadd.f32 %v1137, %v1134
          %1139 = vadd.xlane.f32.xlu0 %v1138
          %v1140 = vpop.xlane.xlu0 %1139
          %v1141 = vrot.slane %v1140, 4
          %v1142 = vadd.f32 %v1140, %v1141
          %v1143 = vrot.slane %v1142, 2
          %v1144 = vadd.f32 %v1142, %v1143
          %v1145 = vrot.slane %v1144, 1
          %v1146 = vadd.f32 %v1144, %v1145
          %s1147 = vtos %v1146
          %s1148 = scalar_lea.smem [#allocation6], 1
          %1149 = sst [smem:[%s1148]] %s1147
          %vm1150 = vcmp.eq.s32.totalorder %v390, 3
          %vm1151 = vcmp.eq.s32.totalorder %v391, 3
          %vm1152 = vcmp.eq.s32.totalorder %v392, 3
          %vm1153 = vcmp.eq.s32.totalorder %v393, 3
          %vm1154 = vcmp.eq.s32.totalorder %v394, 3
          %v1155 = vsel %vm1150, %v1095, 0.0
          %v1156 = vsel %vm1151, %v1096, 0.0
          %v1157 = vsel %vm1152, %v1097, 0.0
          %v1158 = vsel %vm1153, %v1098, 0.0
          %v1159 = vsel %vm1154, %v1099, 0.0
          %v1160 = vadd.f32 %v1155, %v1156
          %v1161 = vadd.f32 %v1160, %v1157
          %v1162 = vadd.f32 %v1161, %v1158
          %v1163 = vadd.f32 %v1162, %v1159
          %1164 = vadd.xlane.f32.xlu0 %v1163
          %v1165 = vpop.xlane.xlu0 %1164
          %v1166 = vrot.slane %v1165, 4
          %v1167 = vadd.f32 %v1165, %v1166
          %v1168 = vrot.slane %v1167, 2
          %v1169 = vadd.f32 %v1167, %v1168
          %v1170 = vrot.slane %v1169, 1
          %v1171 = vadd.f32 %v1169, %v1170
          %s1172 = vtos %v1171
          %s1173 = scalar_lea.smem [#allocation6], 2
          %1174 = sst [smem:[%s1173]] %s1172
          %vm1175 = vcmp.eq.s32.totalorder %v390, 4
          %vm1176 = vcmp.eq.s32.totalorder %v391, 4
          %vm1177 = vcmp.eq.s32.totalorder %v392, 4
          %vm1178 = vcmp.eq.s32.totalorder %v393, 4
          %vm1179 = vcmp.eq.s32.totalorder %v394, 4
          %v1180 = vsel %vm1175, %v1095, 0.0
          %v1181 = vsel %vm1176, %v1096, 0.0
          %v1182 = vsel %vm1177, %v1097, 0.0
          %v1183 = vsel %vm1178, %v1098, 0.0
          %v1184 = vsel %vm1179, %v1099, 0.0
          %v1185 = vadd.f32 %v1180, %v1181
          %v1186 = vadd.f32 %v1185, %v1182
          %v1187 = vadd.f32 %v1186, %v1183
          %v1188 = vadd.f32 %v1187, %v1184
          %1189 = vadd.xlane.f32.xlu0 %v1188
          %v1190 = vpop.xlane.xlu0 %1189
          %v1191 = vrot.slane %v1190, 4
          %v1192 = vadd.f32 %v1190, %v1191
          %v1193 = vrot.slane %v1192, 2
          %v1194 = vadd.f32 %v1192, %v1193
          %v1195 = vrot.slane %v1194, 1
          %v1196 = vadd.f32 %v1194, %v1195
          %s1197 = vtos %v1196
          %s1198 = scalar_lea.smem [#allocation6], 3
          %1199 = sst [smem:[%s1198]] %s1197
          %v1200 = vld [vmem:[#allocation3] sm:$0xff]
          %v1201 = vld [vmem:[#allocation3 + $0x8] sm:$0xff]
          %v1202 = vld [vmem:[#allocation3 + $0x10] sm:$0xff]
          %v1203 = vld [vmem:[#allocation3 + $0x18] sm:$0xff]
          %v1204 = vld [vmem:[#allocation3 + $0x20] sm:$0xff]
          %v1205 = vadd.f32 %v1200, %v1201
          %v1206 = vadd.f32 %v1205, %v1202
          %v1207 = vadd.f32 %v1206, %v1203
          %v1208 = vadd.f32 %v1207, %v1204
          %1209 = vadd.xlane.f32.xlu0 %v1208
          %v1210 = vpop.xlane.xlu0 %1209
          %v1211 = vrot.slane %v1210, 4
          %v1212 = vadd.f32 %v1210, %v1211
          %v1213 = vrot.slane %v1212, 2
          %v1214 = vadd.f32 %v1212, %v1213
          %v1215 = vrot.slane %v1214, 1
          %v1216 = vadd.f32 %v1214, %v1215
          %s1217 = vtos %v1216
          %s1218 = scalar_lea.smem [#allocation6], 4
          %1219 = sst [smem:[%s1218]] %s1217
          %v1220 = vld [vmem:[%s770] sm:$0xff]
          %v1221 = vld [vmem:[%s770 + $0x8] sm:$0xff]
          %v1222 = vld [vmem:[%s770 + $0x10] sm:$0xff]
          %v1223 = vld [vmem:[%s770 + $0x18] sm:$0xff]
          %v1224 = vld [vmem:[%s770 + $0x20] sm:$0xff]
          %v1225 = vadd.f32 %v1220, %v1221
          %v1226 = vadd.f32 %v1225, %v1222
          %v1227 = vadd.f32 %v1226, %v1223
          %v1228 = vadd.f32 %v1227, %v1224
          %1229 = vadd.xlane.f32.xlu0 %v1228
          %v1230 = vpop.xlane.xlu0 %1229
          %v1231 = vrot.slane %v1230, 4
          %v1232 = vadd.f32 %v1230, %v1231
          %v1233 = vrot.slane %v1232, 2
          %v1234 = vadd.f32 %v1232, %v1233
          %v1235 = vrot.slane %v1234, 1
          %v1236 = vadd.f32 %v1234, %v1235
          %s1237 = vtos %v1236
          %s1238 = scalar_lea.smem [#allocation6], 5
          %1239 = sst [smem:[%s1238]] %s1237
          %v1240 = vld [vmem:[%s786] sm:$0xff]
          %v1241 = vld [vmem:[%s786 + $0x8] sm:$0xff]
          %v1242 = vld [vmem:[%s786 + $0x10] sm:$0xff]
          %v1243 = vld [vmem:[%s786 + $0x18] sm:$0xff]
          %v1244 = vld [vmem:[%s786 + $0x20] sm:$0xff]
          %v1245 = vadd.f32 %v1240, %v1241
          %v1246 = vadd.f32 %v1245, %v1242
          %v1247 = vadd.f32 %v1246, %v1243
          %v1248 = vadd.f32 %v1247, %v1244
          %1249 = vadd.xlane.f32.xlu0 %v1248
          %v1250 = vpop.xlane.xlu0 %1249
          %v1251 = vrot.slane %v1250, 4
          %v1252 = vadd.f32 %v1250, %v1251
          %v1253 = vrot.slane %v1252, 2
          %v1254 = vadd.f32 %v1252, %v1253
          %v1255 = vrot.slane %v1254, 1
          %v1256 = vadd.f32 %v1254, %v1255
          %s1257 = vtos %v1256
          %s1258 = scalar_lea.smem [#allocation6], 6
          %1259 = sst [smem:[%s1258]] %s1257
          %v1260 = vld [vmem:[%s802] sm:$0xff]
          %v1261 = vld [vmem:[%s802 + $0x8] sm:$0xff]
          %v1262 = vld [vmem:[%s802 + $0x10] sm:$0xff]
          %v1263 = vld [vmem:[%s802 + $0x18] sm:$0xff]
          %v1264 = vld [vmem:[%s802 + $0x20] sm:$0xff]
          %v1265 = vadd.f32 %v1260, %v1261
          %v1266 = vadd.f32 %v1265, %v1262
          %v1267 = vadd.f32 %v1266, %v1263
          %v1268 = vadd.f32 %v1267, %v1264
          %1269 = vadd.xlane.f32.xlu0 %v1268
          %v1270 = vpop.xlane.xlu0 %1269
          %v1271 = vrot.slane %v1270, 4
          %v1272 = vadd.f32 %v1270, %v1271
          %v1273 = vrot.slane %v1272, 2
          %v1274 = vadd.f32 %v1272, %v1273
          %v1275 = vrot.slane %v1274, 1
          %v1276 = vadd.f32 %v1274, %v1275
          %s1277 = vtos %v1276
          %s1278 = scalar_lea.smem [#allocation6], 7
          %1279 = sst [smem:[%s1278]] %s1277
          %v1280 = vld [vmem:[#allocation4] sm:$0xff]
          %v1281 = vld [vmem:[#allocation4 + $0x8] sm:$0xff]
          %v1282 = vld [vmem:[#allocation4 + $0x10] sm:$0xff]
          %v1283 = vld [vmem:[#allocation4 + $0x18] sm:$0xff]
          %v1284 = vld [vmem:[#allocation4 + $0x20] sm:$0xff]
          %v1285 = vmax.f32 %v1280, %v1284
          %v1286 = vmax.f32 %v1285, %v1281
          %v1287 = vmax.f32 %v1282, %v1283
          %v1288 = vmax.f32 %v1286, %v1287
          %1289 = vmax.xlane.f32.xlu0 %v1288
          %v1290 = vpop.xlane.xlu0 %1289
          %v1291 = vrot.slane %v1290, 4
          %v1292 = vmax.f32 %v1290, %v1291
          %v1293 = vrot.slane %v1292, 2
          %v1294 = vmax.f32 %v1292, %v1293
          %v1295 = vrot.slane %v1294, 1
          %v1296 = vmax.f32 %v1294, %v1295
          %s1297 = vtos %v1296
          %v1298 = vstv %s1297
          %v1299 = vsub.f32 %v1280, %v1298
          %v1300 = vsub.f32 %v1281, %v1298
          %v1301 = vsub.f32 %v1282, %v1298
          %v1302 = vsub.f32 %v1283, %v1298
          %v1303 = vsub.f32 %v1284, %v1298
          %v1304 = vmul.f32 %v1299, 1.442695
          %v1305 = vpow.pop %v1304
          %v1306 = vmul.f32 %v1300, 1.442695
          %v1307 = vpow.pop %v1306
          %v1308 = vmul.f32 %v1301, 1.442695
          %v1309 = vpow.pop %v1308
          %v1310 = vmul.f32 %v1302, 1.442695
          %v1311 = vpow.pop %v1310
          %v1312 = vmul.f32 %v1303, 1.442695
          %v1313 = vpow.pop %v1312
          %v1314 = vld [vmem:[#allocation5] sm:$0xff]
          %v1315 = vld [vmem:[#allocation5 + $0x8] sm:$0xff]
          %v1316 = vld [vmem:[#allocation5 + $0x10] sm:$0xff]
          %v1317 = vld [vmem:[#allocation5 + $0x18] sm:$0xff]
          %v1318 = vld [vmem:[#allocation5 + $0x20] sm:$0xff]
          %v1319 = vmul.f32 %v1314, %v1305
          %v1320 = vmul.f32 %v1315, %v1307
          %v1321 = vmul.f32 %v1316, %v1309
          %v1322 = vmul.f32 %v1317, %v1311
          %v1323 = vmul.f32 %v1318, %v1313
          %v1324 = vadd.f32 %v1319, %v1320
          %v1325 = vadd.f32 %v1324, %v1321
          %v1326 = vadd.f32 %v1325, %v1322
          %v1327 = vadd.f32 %v1326, %v1323
          %1328 = vadd.xlane.f32.xlu0 %v1327
          %v1329 = vpop.xlane.xlu0 %1328
          %v1330 = vrot.slane %v1329, 4
          %v1331 = vadd.f32 %v1329, %v1330
          %v1332 = vrot.slane %v1331, 2
          %v1333 = vadd.f32 %v1331, %v1332
          %v1334 = vrot.slane %v1333, 1
          %v1335 = vadd.f32 %v1333, %v1334
          %s1336 = vtos %v1335
          %s1337 = scalar_lea.smem [#allocation6], 8
          %1338 = sst [smem:[%s1337]] %s1336
          %v1339 = vld [vmem:[%s889] sm:$0xff]
          %v1340 = vld [vmem:[%s889 + $0x8] sm:$0xff]
          %v1341 = vld [vmem:[%s889 + $0x10] sm:$0xff]
          %v1342 = vld [vmem:[%s889 + $0x18] sm:$0xff]
          %v1343 = vld [vmem:[%s889 + $0x20] sm:$0xff]
          %v1344 = vmul.f32 %v1339, %v1305
          %v1345 = vmul.f32 %v1340, %v1307
          %v1346 = vmul.f32 %v1341, %v1309
          %v1347 = vmul.f32 %v1342, %v1311
          %v1348 = vmul.f32 %v1343, %v1313
          %v1349 = vadd.f32 %v1344, %v1345
          %v1350 = vadd.f32 %v1349, %v1346
          %v1351 = vadd.f32 %v1350, %v1347
          %v1352 = vadd.f32 %v1351, %v1348
          %1353 = vadd.xlane.f32.xlu0 %v1352
          %v1354 = vpop.xlane.xlu0 %1353
          %v1355 = vrot.slane %v1354, 4
          %v1356 = vadd.f32 %v1354, %v1355
          %v1357 = vrot.slane %v1356, 2
          %v1358 = vadd.f32 %v1356, %v1357
          %v1359 = vrot.slane %v1358, 1
          %v1360 = vadd.f32 %v1358, %v1359
          %s1361 = vtos %v1360
          %s1362 = scalar_lea.smem [#allocation6], 9
          %1363 = sst [smem:[%s1362]] %s1361
          %s1364 = scalar_lea.smem [#allocation6], 12
          %1365 = sst [smem:[%s1364]] %s1297
          %v1366 = vld [vmem:[%s828] sm:$0xff]
          %v1367 = vld [vmem:[%s828 + $0x8] sm:$0xff]
          %v1368 = vld [vmem:[%s828 + $0x10] sm:$0xff]
          %v1369 = vld [vmem:[%s828 + $0x18] sm:$0xff]
          %v1370 = vld [vmem:[%s828 + $0x20] sm:$0xff]
          %v1371 = vmax.f32 %v1366, %v1370
          %v1372 = vmax.f32 %v1371, %v1367
          %v1373 = vmax.f32 %v1368, %v1369
          %v1374 = vmax.f32 %v1372, %v1373
          %1375 = vmax.xlane.f32.xlu0 %v1374
          %v1376 = vpop.xlane.xlu0 %1375
          %v1377 = vrot.slane %v1376, 4
          %v1378 = vmax.f32 %v1376, %v1377
          %v1379 = vrot.slane %v1378, 2
          %v1380 = vmax.f32 %v1378, %v1379
          %v1381 = vrot.slane %v1380, 1
          %v1382 = vmax.f32 %v1380, %v1381
          %s1383 = vtos %v1382
          %v1384 = vstv %s1383
          %v1385 = vsub.f32 %v1366, %v1384
          %v1386 = vsub.f32 %v1367, %v1384
          %v1387 = vsub.f32 %v1368, %v1384
          %v1388 = vsub.f32 %v1369, %v1384
          %v1389 = vsub.f32 %v1370, %v1384
          %v1390 = vmul.f32 %v1385, 1.442695
          %v1391 = vpow.pop %v1390
          %v1392 = vmul.f32 %v1386, 1.442695
          %v1393 = vpow.pop %v1392
          %v1394 = vmul.f32 %v1387, 1.442695
          %v1395 = vpow.pop %v1394
          %v1396 = vmul.f32 %v1388, 1.442695
          %v1397 = vpow.pop %v1396
          %v1398 = vmul.f32 %v1389, 1.442695
          %v1399 = vpow.pop %v1398
          %v1400 = vld [vmem:[%s900] sm:$0xff]
          %v1401 = vld [vmem:[%s900 + $0x8] sm:$0xff]
          %v1402 = vld [vmem:[%s900 + $0x10] sm:$0xff]
          %v1403 = vld [vmem:[%s900 + $0x18] sm:$0xff]
          %v1404 = vld [vmem:[%s900 + $0x20] sm:$0xff]
          %v1405 = vmul.f32 %v1400, %v1391
          %v1406 = vmul.f32 %v1401, %v1393
          %v1407 = vmul.f32 %v1402, %v1395
          %v1408 = vmul.f32 %v1403, %v1397
          %v1409 = vmul.f32 %v1404, %v1399
          %v1410 = vadd.f32 %v1405, %v1406
          %v1411 = vadd.f32 %v1410, %v1407
          %v1412 = vadd.f32 %v1411, %v1408
          %v1413 = vadd.f32 %v1412, %v1409
          %1414 = vadd.xlane.f32.xlu0 %v1413
          %v1415 = vpop.xlane.xlu0 %1414
          %v1416 = vrot.slane %v1415, 4
          %v1417 = vadd.f32 %v1415, %v1416
          %v1418 = vrot.slane %v1417, 2
          %v1419 = vadd.f32 %v1417, %v1418
          %v1420 = vrot.slane %v1419, 1
          %v1421 = vadd.f32 %v1419, %v1420
          %s1422 = vtos %v1421
          %s1423 = scalar_lea.smem [#allocation6], 10
          %1424 = sst [smem:[%s1423]] %s1422
          %v1425 = vld [vmem:[%s911] sm:$0xff]
          %v1426 = vld [vmem:[%s911 + $0x8] sm:$0xff]
          %v1427 = vld [vmem:[%s911 + $0x10] sm:$0xff]
          %v1428 = vld [vmem:[%s911 + $0x18] sm:$0xff]
          %v1429 = vld [vmem:[%s911 + $0x20] sm:$0xff]
          %v1430 = vmul.f32 %v1425, %v1391
          %v1431 = vmul.f32 %v1426, %v1393
          %v1432 = vmul.f32 %v1427, %v1395
          %v1433 = vmul.f32 %v1428, %v1397
          %v1434 = vmul.f32 %v1429, %v1399
          %v1435 = vadd.f32 %v1430, %v1431
          %v1436 = vadd.f32 %v1435, %v1432
          %v1437 = vadd.f32 %v1436, %v1433
          %v1438 = vadd.f32 %v1437, %v1434
          %1439 = vadd.xlane.f32.xlu0 %v1438
          %v1440 = vpop.xlane.xlu0 %1439
          %v1441 = vrot.slane %v1440, 4
          %v1442 = vadd.f32 %v1440, %v1441
          %v1443 = vrot.slane %v1442, 2
          %v1444 = vadd.f32 %v1442, %v1443
          %v1445 = vrot.slane %v1444, 1
          %v1446 = vadd.f32 %v1444, %v1445
          %s1447 = vtos %v1446
          %s1448 = scalar_lea.smem [#allocation6], 11
          %1449 = sst [smem:[%s1448]] %s1447
          %s1450 = scalar_lea.smem [#allocation6], 13
          %1451 = sst [smem:[%s1450]] %s1383
          %s1452 = scalar_lea.smem [#allocation6], 14
          %1453 = sst [smem:[%s1452]] 0.0
          %s1454 = scalar_lea.smem [#allocation6], 15
          %1455 = sst [smem:[%s1454]] 0.0
        $region50: #{loss_dr_forward.2} parent=27 // pred_fallthru
          _
        // Predicated region
        $region51: #{loss_dr_forward.2} parent=27 // pred_check
          %p1456 = pneg %p79
        $region52: #{loss_dr_forward.2} parent=27 // pred_check_branch
          %1458 = sbr.rel (%p1456) target = $region54
        $region53: #{loss_dr_forward.2} parent=27 // pred_region
          %1460 = vsyncadd [#allocation7], 0
          %s1462 = sshll.u32 %s2, 4
          %s1463 = int_to_ptr.vmem [resolvable:$true] %s1462
          %1465 = dma.smem_to_vmem [#allocation6], 16, %s1463, [#allocation7]
        $region54: #{loss_dr_forward.2} parent=27 // pred_fallthru
          _
        // Predicated region
        $region55: #{loss_dr_forward.2} parent=27 // pred_check
          %p1466 = pneg %p79
        $region56: #{loss_dr_forward.2} parent=27 // pred_check_branch
          %1468 = sbr.rel (%p1466) target = $region58
        $region57: #{loss_dr_forward.2} parent=27 // pred_region
          %1470 = dma.done [#allocation7], 16
        $region58: #{loss_dr_forward.2} parent=27 // pred_fallthru
          _
        %1471 = sfence
      $region28: #{loss_dr_forward.2} parent=5 // pred_fallthru
        _
      %p1472 = scmp.le.s32.totalorder 2, %s9
      // Predicated region
      $region59: #{loss_dr_forward.2} parent=5 // pred_check
        %p1473 = pneg %p1472
      $region60: #{loss_dr_forward.2} parent=5 // pred_check_branch
        %1475 = sbr.rel (%p1473) target = $region62
      $region61: #{loss_dr_forward.2} parent=5 // pred_region
        %s1476 = ssub.s32 %s9, 2
      $region62: #{loss_dr_forward.2} parent=5 // pred_fallthru
        _
    $region6: #{loss_dr_forward.2} parent=1 // loop_footer
      %s13 = sadd.s32 1, %s9
    $region7: #{loss_dr_forward.2} parent=1 // loop_footer_branch
      %8 = sbr.rel target = $region3
    $region8: #{loss_dr_forward.2} parent=1 // loop_exit
      _
    %1477 = vsyncpa [#allocation7], 1
    %s1478 = scalar_lea.sflag [#allocation7], 1
    %1479 = vsyncpa %s1478, 1

// kernel: loss_dr_forward.3
$region0: #{loss_dr_forward.3}
  #allocation0 [shape = 'u32[]', space=smem, size = 0x4, offset = 0x4, fixed_abs, tag = 'smem constant byte address 0x4 - core index']
  #allocation1 [shape = 'u32[72,128]{1,0:T(1,128)}', space=vmem, size = 0x9000, scoped, tag = 'internal scratch']
  #allocation2 [shape = 'f32[8,512]{1,0:T(8,128)}', space=vmem, size = 0x4000, scoped, tag = 'scratch operand']
  %s0 = inlined_call_operand.vmem [shape: f32[1024,512], index: 0, kind: input, shape index: {}]
  %s1 = inlined_call_operand.vmem [shape: f32[1024,512], index: 1, kind: input, shape index: {}]
  %s2 = inlined_call_operand.hbm [shape: f32[1], index: 2, kind: output, shape index: {}]
  %s3 = sld [smem:[#allocation0]]
  $region33: #{loss_dr_forward.3} parent=0
    _
  %s5 = ssub.s32 1, %s3
  %s6 = scalar_select 0, %s5, %s3
  $region1: #{loss_dr_forward.3} parent=0
    #allocation3 [shape = 'u8[512]{0}', space=smem, size = 0x200, scoped, tag = 'output window, operand 0, single buffered']
    #allocation4 [shape = 's32[1]{0}', space=sflag, size = 0x4, scoped, tag = 'scoped memory for loss_dr_forward.3']
    %7 = vsyncpa [#allocation4], 0
    // Predicated region
    $region2: #{loss_dr_forward.3} parent=1 // pred_check
      _
    $region3: #{loss_dr_forward.3} parent=1 // pred_check_branch
      %9 = sbr.rel (0) target = $region5
    $region4: #{loss_dr_forward.3} parent=1 // pred_region
      _
    $region5: #{loss_dr_forward.3} parent=1 // pred_fallthru
      _
    // Predicated region
    $region6: #{loss_dr_forward.3} parent=1 // pred_check
      _
    $region7: #{loss_dr_forward.3} parent=1 // pred_check_branch
      %11 = sbr.rel (0) target = $region9
    $region8: #{loss_dr_forward.3} parent=1 // pred_region
      _
    $region9: #{loss_dr_forward.3} parent=1 // pred_fallthru
      _
    %p12 = scmp.eq.s32.totalorder 0, 0
    // Predicated region
    $region10: #{loss_dr_forward.3} parent=1 // pred_check
      %p13 = pneg %p12
    $region11: #{loss_dr_forward.3} parent=1 // pred_check_branch
      %15 = sbr.rel (%p13) target = $region13
    $region12: #{loss_dr_forward.3} parent=1 // pred_region
      %16 = vst [vmem:[#allocation2] sm:$0xff] 0.0
      %17 = vst [vmem:[#allocation2 + $0x8] sm:$0xff] 0.0
      %18 = vst [vmem:[#allocation2 + $0x10] sm:$0xff] 0.0
      %19 = vst [vmem:[#allocation2 + $0x18] sm:$0xff] 0.0
    $region13: #{loss_dr_forward.3} parent=1 // pred_fallthru
      _
    %v20 = vld [vmem:[#allocation2] sm:$0xff]
    %v21 = vld [vmem:[#allocation2 + $0x8] sm:$0xff]
    %v22 = vld [vmem:[#allocation2 + $0x10] sm:$0xff]
    %v23 = vld [vmem:[#allocation2 + $0x18] sm:$0xff]
    loop: start=0, step=1, limit=128
    $region14: #{loss_dr_forward.3} parent=1 // loop_pre_header
      _
    $region15: #{loss_dr_forward.3} parent=1 // loop_header
      %s25 = sphi 0, %s29
      %p26 = scmp.ge.s32.totalorder %s25, 128
      %v30 = vphi 0.0, %v58
      %v31 = vphi 0.0, %v59
      %v32 = vphi 0.0, %v60
      %v33 = vphi 0.0, %v61
    $region16: #{loss_dr_forward.3} parent=1 // loop_header_branch
      %28 = sbr.rel (%p26) target = $region20
    $region17: #{loss_dr_forward.3} parent=1 // loop_body
      %s34 = smul.u32 %s25, 8
      %s35 = sshra.s32 %s34, 3
      %s36 = sand.u32 %s34, 7
      %s37 = smul.u32 %s35, 4
      %s38 = smul.addr %s37, 8
      %s39 = scalar_lea.vmem %s0, %s38
      %v40 = vld [vmem:[%s39] sm:$0xff]
      %v41 = vld [vmem:[%s39 + $0x8] sm:$0xff]
      %v42 = vld [vmem:[%s39 + $0x10] sm:$0xff]
      %v43 = vld [vmem:[%s39 + $0x18] sm:$0xff]
      %s44 = smul.addr %s37, 8
      %s45 = scalar_lea.vmem %s1, %s44
      %v46 = vld [vmem:[%s45] sm:$0xff]
      %v47 = vld [vmem:[%s45 + $0x8] sm:$0xff]
      %v48 = vld [vmem:[%s45 + $0x10] sm:$0xff]
      %v49 = vld [vmem:[%s45 + $0x18] sm:$0xff]
      %v50 = vsub.f32 %v40, %v46
      %v51 = vsub.f32 %v41, %v47
      %v52 = vsub.f32 %v42, %v48
      %v53 = vsub.f32 %v43, %v49
      %v54 = vmul.f32 %v50, %v50
      %v55 = vmul.f32 %v51, %v51
      %v56 = vmul.f32 %v52, %v52
      %v57 = vmul.f32 %v53, %v53
      %v58 = vadd.f32 %v30, %v54
      %v59 = vadd.f32 %v31, %v55
      %v60 = vadd.f32 %v32, %v56
      %v61 = vadd.f32 %v33, %v57
    $region18: #{loss_dr_forward.3} parent=1 // loop_footer
      %s29 = sadd.s32 1, %s25
    $region19: #{loss_dr_forward.3} parent=1 // loop_footer_branch
      %24 = sbr.rel target = $region15
    $region20: #{loss_dr_forward.3} parent=1 // loop_exit
      _
    %v62 = vadd.f32 %v20, %v30
    %v63 = vadd.f32 %v21, %v31
    %v64 = vadd.f32 %v22, %v32
    %v65 = vadd.f32 %v23, %v33
    %66 = vst [vmem:[#allocation2] sm:$0xff] %v62
    %67 = vst [vmem:[#allocation2 + $0x8] sm:$0xff] %v63
    %68 = vst [vmem:[#allocation2 + $0x10] sm:$0xff] %v64
    %69 = vst [vmem:[#allocation2 + $0x18] sm:$0xff] %v65
    // Predicated region
    $region21: #{loss_dr_forward.3} parent=1 // pred_check
      %p70 = pneg %p12
    $region22: #{loss_dr_forward.3} parent=1 // pred_check_branch
      %72 = sbr.rel (%p70) target = $region24
    $region23: #{loss_dr_forward.3} parent=1 // pred_region
      %v73 = vld [vmem:[#allocation2] sm:$0xff]
      %v74 = vld [vmem:[#allocation2 + $0x8] sm:$0xff]
      %v75 = vld [vmem:[#allocation2 + $0x10] sm:$0xff]
      %v76 = vld [vmem:[#allocation2 + $0x18] sm:$0xff]
      %v77 = vadd.f32 %v73, %v74
      %v78 = vadd.f32 %v77, %v75
      %v79 = vadd.f32 %v78, %v76
      %80 = vadd.xlane.f32.xlu0 %v79
      %v81 = vpop.xlane.xlu0 %80
      %v82 = vrot.slane %v81, 4
      %v83 = vadd.f32 %v81, %v82
      %v84 = vrot.slane %v83, 2
      %v85 = vadd.f32 %v83, %v84
      %v86 = vrot.slane %v85, 1
      %v87 = vadd.f32 %v85, %v86
      %s88 = vtos %v87
      %s89 = scalar_lea.smem [#allocation3], 0
      %90 = sst [smem:[%s89]] %s88
    $region24: #{loss_dr_forward.3} parent=1 // pred_fallthru
      _
    // Predicated region
    $region25: #{loss_dr_forward.3} parent=1 // pred_check
      _
    $region26: #{loss_dr_forward.3} parent=1 // pred_check_branch
      %92 = sbr.rel (0) target = $region28
    $region27: #{loss_dr_forward.3} parent=1 // pred_region
      %94 = vsyncadd [#allocation4], 0
      %s96 = sshll.u32 %s2, 4
      %s97 = int_to_ptr.hbm [resolvable:$true] %s96
      %99 = dma.smem_to_hbm [#allocation3], 16, %s97, [#allocation4]
    $region28: #{loss_dr_forward.3} parent=1 // pred_fallthru
      _
    // Predicated region
    $region29: #{loss_dr_forward.3} parent=1 // pred_check
      _
    $region30: #{loss_dr_forward.3} parent=1 // pred_check_branch
      %101 = sbr.rel (0) target = $region32
    $region31: #{loss_dr_forward.3} parent=1 // pred_region
      %103 = dma.done [#allocation4], 16
    $region32: #{loss_dr_forward.3} parent=1 // pred_fallthru
      _
    %104 = sfence
    %105 = vsyncpa [#allocation4], 1

</llo_original>
